<compile_context>
chip_gen: v7x
topology: tpu7x:2x2x1
jax: 0.10.0
libtpu: 0.0.40
codegen_flags: <defaults>
</compile_context>

<pallas_src>
import jax
import jax.numpy as jnp
from jax.experimental import pallas as pl
from jax.experimental.pallas import tpu as pltpu


def bottleneck_kernel(x_ref, w1_ref, w2_ref, w3_ref,
                      s1_ref, b1_ref, s2_ref, b2_ref, s3_ref, b3_ref,
                      o_ref, pad_ref):
    # x_ref:   (1, H, W, Cin)  f32
    # w1_ref:  (Cin, width)    bf16
    # w2_ref:  (3, 3*width, width) bf16
    # w3_ref:  (width, Cout)   bf16
    # s*/b*:   (1, C)          f32 fused BN scale / bias
    # o_ref:   (1, H, W, Cout) f32
    # pad_ref: (H+2, W+2, width) f32 scratch (zero halo + conv1 output interior)
    _, H, W, Cin = x_ref.shape
    width = w1_ref.shape[1]
    Cout = w3_ref.shape[1]

    x = x_ref[0]                                   # (H, W, Cin) f32
    xf = x.reshape(H * W, Cin)                     # channels on lanes
    x_bf = xf.astype(jnp.bfloat16)

    # ---- conv1 (1x1) + bn1 + relu ----  (bf16 MXU operands, f32 accumulate)
    h = jnp.dot(x_bf, w1_ref[...], preferred_element_type=jnp.float32)
    h = jnp.maximum(h * s1_ref[...] + b1_ref[...], 0.0)        # (H*W, width) f32

    # Zero only the 1-wide halo (cheap, O(H+W) elements); the interior is fully
    # rewritten below, so no full-buffer zeroing per grid step, and no reliance
    # on cross-iteration scratch state (safe under megacore "parallel" split).
    zrow = jnp.zeros((1, W + 2, width), pad_ref.dtype)
    zcol = jnp.zeros((H + 2, 1, width), pad_ref.dtype)
    pad_ref[0:1, :, :] = zrow
    pad_ref[H + 1:H + 2, :, :] = zrow
    pad_ref[:, 0:1, :] = zcol
    pad_ref[:, W + 1:W + 2, :] = zcol
    # conv1+bn1+relu result written straight into the pad interior.
    pad_ref[1:H + 1, 1:W + 1, :] = h.reshape(H, W, width)

    # ---- conv2 (3x3, stride=1, pad=1) + bn2 + relu ----
    # Per dy: one contiguous row-slab load, concatenate the three dx-shifted
    # windows along channels -> a single K = 3*width matmul against
    # w2_ref[dy] (shape (3*width, width)).  3 matmuls total instead of 9.
    acc = jnp.zeros((H * W, width), jnp.float32)
    for dy in range(3):
        rows = pad_ref[dy:dy + H]                  # (H, W+2, width) f32
        cat = jnp.concatenate(
            [rows[:, dx:dx + W, :] for dx in range(3)], axis=-1)
        cat = cat.reshape(H * W, 3 * width).astype(jnp.bfloat16)
        acc = acc + jnp.dot(cat, w2_ref[dy],
                            preferred_element_type=jnp.float32)
    h2 = jnp.maximum(acc * s2_ref[...] + b2_ref[...], 0.0)     # (H*W, width) f32

    # ---- conv3 (1x1) + bn3 + residual add + relu ----
    h3 = jnp.dot(h2.astype(jnp.bfloat16), w3_ref[...],
                 preferred_element_type=jnp.float32)
    h3 = h3 * s3_ref[...] + b3_ref[...]
    out = jnp.maximum(h3 + xf, 0.0)                # identity add (Cin == Cout)
    o_ref[0] = out.reshape(H, W, Cout).astype(o_ref.dtype)


def bottleneck_pallas(x_nchw, params):
    """x_nchw: (N, Cin, H, W) float32 -> (N, Cout, H, W) float32."""
    w1, w2, w3, s1, b1, s2, b2, s3, b3 = params
    N, Cin, H, W = x_nchw.shape
    width = w1.shape[1]
    Cout = w3.shape[1]
    assert Cin == Cout, "Bottleneck with downsample=None requires inplanes == 4*planes"

    x = jnp.transpose(x_nchw, (0, 2, 3, 1))        # NCHW -> NHWC

    # bf16 weights for the MXU.  w2 collapsed over (dx, cin) so each dy tap is a
    # single matmul whose K dimension is 3*width.
    w1_k = w1.astype(jnp.bfloat16)
    w2_k = w2.reshape(3, 3 * width, width).astype(jnp.bfloat16)
    w3_k = w3.astype(jnp.bfloat16)

    flops = int(2 * N * H * W * (Cin * width + 9 * width * width + width * Cout))
    bytes_accessed = int(
        x.size * 4 + N * H * W * Cout * 4
        + (w1_k.size + w2_k.size + w3_k.size) * 2
        + (s1.size + b1.size + s2.size + b2.size + s3.size + b3.size) * 4)

    # TODO(synk): for large ResNet stage shapes (e.g. 56x56x256 on v5e's 16 MiB /
    # v7x's 64 MiB VMEM), add a row-tile grid axis with a 1-row halo and set
    # vmem_limit_bytes; one image per grid step is fine at these sizes.
    out = pl.pallas_call(
        bottleneck_kernel,
        out_shape=jax.ShapeDtypeStruct((N, H, W, Cout), x.dtype),
        grid_spec=pltpu.PrefetchScalarGridSpec(
            num_scalar_prefetch=0,
            grid=(N,),
            in_specs=[
                pl.BlockSpec((1, H, W, Cin), lambda n: (n, 0, 0, 0)),
                pl.BlockSpec((Cin, width), lambda n: (0, 0)),
                pl.BlockSpec((3, 3 * width, width), lambda n: (0, 0, 0)),
                pl.BlockSpec((width, Cout), lambda n: (0, 0)),
                pl.BlockSpec((1, width), lambda n: (0, 0)),
                pl.BlockSpec((1, width), lambda n: (0, 0)),
                pl.BlockSpec((1, width), lambda n: (0, 0)),
                pl.BlockSpec((1, width), lambda n: (0, 0)),
                pl.BlockSpec((1, Cout), lambda n: (0, 0)),
                pl.BlockSpec((1, Cout), lambda n: (0, 0)),
            ],
            out_specs=pl.BlockSpec((1, H, W, Cout), lambda n: (n, 0, 0, 0)),
            scratch_shapes=[pltpu.VMEM((H + 2, W + 2, width), jnp.float32)],
        ),
        compiler_params=pltpu.CompilerParams(dimension_semantics=("parallel",)),
        cost_estimate=pl.CostEstimate(flops=flops, transcendentals=0,
                                      bytes_accessed=bytes_accessed),
    )(x, w1_k, w2_k, w3_k, s1, b1, s2, b2, s3, b3)

    return jnp.transpose(out, (0, 3, 1, 2))        # NHWC -> NCHW


def bottleneck_reference(x_nchw, params):
    """Pure-JAX reference with the same numerics (bf16 MXU operands, f32 acc)."""
    w1, w2, w3, s1, b1, s2, b2, s3, b3 = params
    bf = jnp.bfloat16
    x = jnp.transpose(x_nchw, (0, 2, 3, 1)).astype(jnp.float32)
    N, H, W, Cin = x.shape
    width = w1.shape[1]
    h = jnp.einsum('nhwc,cd->nhwd', x.astype(bf), w1.astype(bf),
                   preferred_element_type=jnp.float32)
    h = jnp.maximum(h * s1 + b1, 0.0)
    hp = jnp.pad(h.astype(bf), ((0, 0), (1, 1), (1, 1), (0, 0)))
    acc = jnp.zeros((N, H, W, width), jnp.float32)
    for dy in range(3):
        for dx in range(3):
            acc = acc + jnp.einsum('nhwc,cd->nhwd',
                                   hp[:, dy:dy + H, dx:dx + W, :],
                                   w2[dy, dx].astype(bf),
                                   preferred_element_type=jnp.float32)
    h2 = jnp.maximum(acc * s2 + b2, 0.0)
    h3 = jnp.einsum('nhwc,cd->nhwd', h2.astype(bf), w3.astype(bf),
                    preferred_element_type=jnp.float32)
    h3 = h3 * s3 + b3
    out = jnp.maximum(h3 + x, 0.0)
    return jnp.transpose(out, (0, 3, 1, 2))


def make_params(key, inplanes, planes, expansion=4, base_width=64, groups=1):
    width = int(planes * (base_width / 64.0)) * groups
    cout = planes * expansion
    eps = 1e-5
    ks = jax.random.split(key, 12)

    w1 = jax.random.normal(ks[0], (inplanes, width), jnp.float32) * 0.1
    w2 = jax.random.normal(ks[1], (3, 3, width, width), jnp.float32) * 0.1
    w3 = jax.random.normal(ks[2], (width, cout), jnp.float32) * 0.1

    def fused_bn(kg, kb, km, kv, c):
        gamma = 1.0 + 0.1 * jax.random.normal(kg, (1, c), jnp.float32)
        beta = 0.1 * jax.random.normal(kb, (1, c), jnp.float32)
        rmean = 0.1 * jax.random.normal(km, (1, c), jnp.float32)
        rvar = jnp.abs(jax.random.normal(kv, (1, c), jnp.float32)) + 0.5
        scale = gamma / jnp.sqrt(rvar + eps)
        bias = beta - rmean * scale
        return scale, bias

    s1, b1 = fused_bn(ks[3], ks[4], ks[5], ks[6], width)
    s2, b2 = fused_bn(ks[7], ks[8], ks[9], ks[10], width)
    k3 = jax.random.split(ks[11], 4)
    s3, b3 = fused_bn(k3[0], k3[1], k3[2], k3[3], cout)
    return (w1, w2, w3, s1, b1, s2, b2, s3, b3)


if __name__ == "__main__":
    # Small shapes consistent with Bottleneck(inplanes=16, planes=4):
    #   width = 4, out channels = planes * 4 = 16 == inplanes (residual add works).
    N, inplanes, planes, H, W = 2, 16, 4, 8, 8
    key = jax.random.PRNGKey(0)
    kx, kp = jax.random.split(key)
    x = jax.random.normal(kx, (N, inplanes, H, W), jnp.float32)
    params = make_params(kp, inplanes, planes)

    out = jax.block_until_ready(bottleneck_pallas(x, params))
    ref = jax.block_until_ready(bottleneck_reference(x, params))
    assert out.shape == (N, inplanes, H, W)
    # bf16 matmul operands -> compare against the bf16-matched reference.
    max_err = float(jnp.max(jnp.abs(out - ref)))
    assert jnp.allclose(out, ref, atol=1e-2, rtol=1e-2), \
        f"mismatch vs reference (max abs err {max_err})"

    # TODO(synk): BatchNorm is implemented in eval mode (fused running stats);
    # PyTorch's default training-mode batch statistics are not reproduced.
    print("KERNEL_OK")
</pallas_src>

<mosaic_0001>
module attributes {stable_mosaic.version = 11 : i64} {
  func.func @bottleneck_kernel(%arg0: i32, %arg1: memref<1x8x8x16xf32, #tpu.memory_space<vmem>>, %arg2: memref<16x4xbf16, #tpu.memory_space<vmem>>, %arg3: memref<3x12x4xbf16, #tpu.memory_space<vmem>>, %arg4: memref<4x16xbf16, #tpu.memory_space<vmem>>, %arg5: memref<1x4xf32, #tpu.memory_space<vmem>>, %arg6: memref<1x4xf32, #tpu.memory_space<vmem>>, %arg7: memref<1x4xf32, #tpu.memory_space<vmem>>, %arg8: memref<1x4xf32, #tpu.memory_space<vmem>>, %arg9: memref<1x16xf32, #tpu.memory_space<vmem>>, %arg10: memref<1x16xf32, #tpu.memory_space<vmem>>, %arg11: memref<1x8x8x16xf32, #tpu.memory_space<vmem>>, %arg12: memref<10x10x4xf32, #tpu.memory_space<vmem>>) attributes {dimension_semantics = [#tpu.dimension_semantics<parallel>], iteration_bounds = array<i64: 2>, scalar_prefetch = 0 : i64, scratch_operands = 1 : i64, tpu.core_type = #tpu.core_type<tc>, window_params = [{transform_indices = @transform_0, window_bounds = array<i64: 1, 8, 8, 16>}, {pipeline_mode = #tpu.pipeline_mode<synchronous>, transform_indices = @transform_1, window_bounds = array<i64: 16, 4>}, {pipeline_mode = #tpu.pipeline_mode<synchronous>, transform_indices = @transform_2, window_bounds = array<i64: 3, 12, 4>}, {pipeline_mode = #tpu.pipeline_mode<synchronous>, transform_indices = @transform_3, window_bounds = array<i64: 4, 16>}, {pipeline_mode = #tpu.pipeline_mode<synchronous>, transform_indices = @transform_4, window_bounds = array<i64: 1, 4>}, {pipeline_mode = #tpu.pipeline_mode<synchronous>, transform_indices = @transform_5, window_bounds = array<i64: 1, 4>}, {pipeline_mode = #tpu.pipeline_mode<synchronous>, transform_indices = @transform_6, window_bounds = array<i64: 1, 4>}, {pipeline_mode = #tpu.pipeline_mode<synchronous>, transform_indices = @transform_7, window_bounds = array<i64: 1, 4>}, {pipeline_mode = #tpu.pipeline_mode<synchronous>, transform_indices = @transform_8, window_bounds = array<i64: 1, 16>}, {pipeline_mode = #tpu.pipeline_mode<synchronous>, transform_indices = @transform_9, window_bounds = array<i64: 1, 16>}, {transform_indices = @transform_10, window_bounds = array<i64: 1, 8, 8, 16>}]} {
    %c0 = arith.constant 0 : index
    %c0_0 = arith.constant 0 : index
    %c0_1 = arith.constant 0 : index
    %c0_2 = arith.constant 0 : index
    %0 = vector.load %arg1[%c0, %c0_0, %c0_1, %c0_2] : memref<1x8x8x16xf32, #tpu.memory_space<vmem>>, vector<1x8x8x16xf32>
    %1 = vector.shape_cast %0 : vector<1x8x8x16xf32> to vector<8x8x16xf32>
    %2 = vector.shape_cast %1 : vector<8x8x16xf32> to vector<64x16xf32>
    %3 = arith.truncf %2 : vector<64x16xf32> to vector<64x16xbf16>
    %c0_3 = arith.constant 0 : index
    %c0_4 = arith.constant 0 : index
    %4 = vector.load %arg2[%c0_3, %c0_4] : memref<16x4xbf16, #tpu.memory_space<vmem>>, vector<16x4xbf16>
    %cst = arith.constant dense<0.000000e+00> : vector<64x4xf32>
    %5 = tpu.matmul %3, %4, %cst {dimension_numbers = #tpu.dot_dimension_numbers<[1], [0], [0], [1], [0, 0, 1, 1], [], []>} : vector<64x16xbf16>, vector<16x4xbf16>, vector<64x4xf32> -> vector<64x4xf32>
    %c0_5 = arith.constant 0 : index
    %c0_6 = arith.constant 0 : index
    %6 = vector.load %arg5[%c0_5, %c0_6] : memref<1x4xf32, #tpu.memory_space<vmem>>, vector<1x4xf32>
    %7 = vector.broadcast %6 : vector<1x4xf32> to vector<64x4xf32>
    %8 = arith.mulf %5, %7 : vector<64x4xf32>
    %c0_7 = arith.constant 0 : index
    %c0_8 = arith.constant 0 : index
    %9 = vector.load %arg6[%c0_7, %c0_8] : memref<1x4xf32, #tpu.memory_space<vmem>>, vector<1x4xf32>
    %10 = vector.broadcast %9 : vector<1x4xf32> to vector<64x4xf32>
    %11 = arith.addf %8, %10 : vector<64x4xf32>
    %cst_9 = arith.constant 0.000000e+00 : f32
    %12 = vector.broadcast %cst_9 : f32 to vector<64x4xf32>
    %13 = arith.maximumf %11, %12 : vector<64x4xf32>
    %cst_10 = arith.constant 0.000000e+00 : f32
    %14 = vector.broadcast %cst_10 : f32 to vector<1x10x4xf32>
    %cst_11 = arith.constant 0.000000e+00 : f32
    %15 = vector.broadcast %cst_11 : f32 to vector<10x1x4xf32>
    %c0_12 = arith.constant 0 : index
    %c0_13 = arith.constant 0 : index
    %c0_14 = arith.constant 0 : index
    %16 = vector.load %arg12[%c0_12, %c0_13, %c0_14] : memref<10x10x4xf32, #tpu.memory_space<vmem>>, vector<1x10x4xf32>
    tpu.vector_store %arg12[%c0_12, %c0_13, %c0_14], %14 {strides = array<i32>} : memref<10x10x4xf32, #tpu.memory_space<vmem>>, vector<1x10x4xf32>,
    %c9 = arith.constant 9 : index
    %c0_15 = arith.constant 0 : index
    %c0_16 = arith.constant 0 : index
    %17 = vector.load %arg12[%c9, %c0_15, %c0_16] : memref<10x10x4xf32, #tpu.memory_space<vmem>>, vector<1x10x4xf32>
    tpu.vector_store %arg12[%c9, %c0_15, %c0_16], %14 {strides = array<i32>} : memref<10x10x4xf32, #tpu.memory_space<vmem>>, vector<1x10x4xf32>,
    %c0_17 = arith.constant 0 : index
    %c0_18 = arith.constant 0 : index
    %c0_19 = arith.constant 0 : index
    %18 = vector.load %arg12[%c0_17, %c0_18, %c0_19] : memref<10x10x4xf32, #tpu.memory_space<vmem>>, vector<10x1x4xf32>
    tpu.vector_store %arg12[%c0_17, %c0_18, %c0_19], %15 {strides = array<i32>} : memref<10x10x4xf32, #tpu.memory_space<vmem>>, vector<10x1x4xf32>,
    %c0_20 = arith.constant 0 : index
    %c9_21 = arith.constant 9 : index
    %c0_22 = arith.constant 0 : index
    %19 = vector.load %arg12[%c0_20, %c9_21, %c0_22] : memref<10x10x4xf32, #tpu.memory_space<vmem>>, vector<10x1x4xf32>
    tpu.vector_store %arg12[%c0_20, %c9_21, %c0_22], %15 {strides = array<i32>} : memref<10x10x4xf32, #tpu.memory_space<vmem>>, vector<10x1x4xf32>,
    %20 = vector.shape_cast %13 : vector<64x4xf32> to vector<8x8x4xf32>
    %c1 = arith.constant 1 : index
    %c1_23 = arith.constant 1 : index
    %c0_24 = arith.constant 0 : index
    %21 = vector.load %arg12[%c1, %c1_23, %c0_24] : memref<10x10x4xf32, #tpu.memory_space<vmem>>, vector<8x8x4xf32>
    tpu.vector_store %arg12[%c1, %c1_23, %c0_24], %20 {strides = array<i32>} : memref<10x10x4xf32, #tpu.memory_space<vmem>>, vector<8x8x4xf32>,
    %cst_25 = arith.constant 0.000000e+00 : f32
    %22 = vector.broadcast %cst_25 : f32 to vector<64x4xf32>
    %c0_26 = arith.constant 0 : index
    %c0_27 = arith.constant 0 : index
    %c0_28 = arith.constant 0 : index
    %23 = vector.load %arg12[%c0_26, %c0_27, %c0_28] : memref<10x10x4xf32, #tpu.memory_space<vmem>>, vector<8x10x4xf32>
    %24 = vector.extract_strided_slice %23 {offsets = [0, 0, 0], sizes = [8, 8, 4], strides = [1, 1, 1]} : vector<8x10x4xf32> to vector<8x8x4xf32>
    %25 = vector.extract_strided_slice %23 {offsets = [0, 1, 0], sizes = [8, 8, 4], strides = [1, 1, 1]} : vector<8x10x4xf32> to vector<8x8x4xf32>
    %26 = vector.extract_strided_slice %23 {offsets = [0, 2, 0], sizes = [8, 8, 4], strides = [1, 1, 1]} : vector<8x10x4xf32> to vector<8x8x4xf32>
    %27 = tpu.concatenate %24, %25, %26 in 2 : vector<8x8x4xf32>, vector<8x8x4xf32>, vector<8x8x4xf32> -> vector<8x8x12xf32>
    %28 = vector.shape_cast %27 : vector<8x8x12xf32> to vector<64x12xf32>
    %29 = arith.truncf %28 : vector<64x12xf32> to vector<64x12xbf16>
    %c0_29 = arith.constant 0 : index
    %c0_30 = arith.constant 0 : index
    %c0_31 = arith.constant 0 : index
    %30 = vector.load %arg3[%c0_29, %c0_30, %c0_31] : memref<3x12x4xbf16, #tpu.memory_space<vmem>>, vector<1x12x4xbf16>
    %31 = vector.shape_cast %30 : vector<1x12x4xbf16> to vector<12x4xbf16>
    %cst_32 = arith.constant dense<0.000000e+00> : vector<64x4xf32>
    %32 = tpu.matmul %29, %31, %cst_32 {dimension_numbers = #tpu.dot_dimension_numbers<[1], [0], [0], [1], [0, 0, 1, 1], [], []>} : vector<64x12xbf16>, vector<12x4xbf16>, vector<64x4xf32> -> vector<64x4xf32>
    %33 = arith.addf %22, %32 : vector<64x4xf32>
    %c1_33 = arith.constant 1 : index
    %c0_34 = arith.constant 0 : index
    %c0_35 = arith.constant 0 : index
    %34 = vector.load %arg12[%c1_33, %c0_34, %c0_35] : memref<10x10x4xf32, #tpu.memory_space<vmem>>, vector<8x10x4xf32>
    %35 = vector.extract_strided_slice %34 {offsets = [0, 0, 0], sizes = [8, 8, 4], strides = [1, 1, 1]} : vector<8x10x4xf32> to vector<8x8x4xf32>
    %36 = vector.extract_strided_slice %34 {offsets = [0, 1, 0], sizes = [8, 8, 4], strides = [1, 1, 1]} : vector<8x10x4xf32> to vector<8x8x4xf32>
    %37 = vector.extract_strided_slice %34 {offsets = [0, 2, 0], sizes = [8, 8, 4], strides = [1, 1, 1]} : vector<8x10x4xf32> to vector<8x8x4xf32>
    %38 = tpu.concatenate %35, %36, %37 in 2 : vector<8x8x4xf32>, vector<8x8x4xf32>, vector<8x8x4xf32> -> vector<8x8x12xf32>
    %39 = vector.shape_cast %38 : vector<8x8x12xf32> to vector<64x12xf32>
    %40 = arith.truncf %39 : vector<64x12xf32> to vector<64x12xbf16>
    %c1_36 = arith.constant 1 : index
    %c0_37 = arith.constant 0 : index
    %c0_38 = arith.constant 0 : index
    %41 = vector.load %arg3[%c1_36, %c0_37, %c0_38] : memref<3x12x4xbf16, #tpu.memory_space<vmem>>, vector<1x12x4xbf16>
    %42 = vector.shape_cast %41 : vector<1x12x4xbf16> to vector<12x4xbf16>
    %cst_39 = arith.constant dense<0.000000e+00> : vector<64x4xf32>
    %43 = tpu.matmul %40, %42, %cst_39 {dimension_numbers = #tpu.dot_dimension_numbers<[1], [0], [0], [1], [0, 0, 1, 1], [], []>} : vector<64x12xbf16>, vector<12x4xbf16>, vector<64x4xf32> -> vector<64x4xf32>
    %44 = arith.addf %33, %43 : vector<64x4xf32>
    %c2 = arith.constant 2 : index
    %c0_40 = arith.constant 0 : index
    %c0_41 = arith.constant 0 : index
    %45 = vector.load %arg12[%c2, %c0_40, %c0_41] : memref<10x10x4xf32, #tpu.memory_space<vmem>>, vector<8x10x4xf32>
    %46 = vector.extract_strided_slice %45 {offsets = [0, 0, 0], sizes = [8, 8, 4], strides = [1, 1, 1]} : vector<8x10x4xf32> to vector<8x8x4xf32>
    %47 = vector.extract_strided_slice %45 {offsets = [0, 1, 0], sizes = [8, 8, 4], strides = [1, 1, 1]} : vector<8x10x4xf32> to vector<8x8x4xf32>
    %48 = vector.extract_strided_slice %45 {offsets = [0, 2, 0], sizes = [8, 8, 4], strides = [1, 1, 1]} : vector<8x10x4xf32> to vector<8x8x4xf32>
    %49 = tpu.concatenate %46, %47, %48 in 2 : vector<8x8x4xf32>, vector<8x8x4xf32>, vector<8x8x4xf32> -> vector<8x8x12xf32>
    %50 = vector.shape_cast %49 : vector<8x8x12xf32> to vector<64x12xf32>
    %51 = arith.truncf %50 : vector<64x12xf32> to vector<64x12xbf16>
    %c2_42 = arith.constant 2 : index
    %c0_43 = arith.constant 0 : index
    %c0_44 = arith.constant 0 : index
    %52 = vector.load %arg3[%c2_42, %c0_43, %c0_44] : memref<3x12x4xbf16, #tpu.memory_space<vmem>>, vector<1x12x4xbf16>
    %53 = vector.shape_cast %52 : vector<1x12x4xbf16> to vector<12x4xbf16>
    %cst_45 = arith.constant dense<0.000000e+00> : vector<64x4xf32>
    %54 = tpu.matmul %51, %53, %cst_45 {dimension_numbers = #tpu.dot_dimension_numbers<[1], [0], [0], [1], [0, 0, 1, 1], [], []>} : vector<64x12xbf16>, vector<12x4xbf16>, vector<64x4xf32> -> vector<64x4xf32>
    %55 = arith.addf %44, %54 : vector<64x4xf32>
    %c0_46 = arith.constant 0 : index
    %c0_47 = arith.constant 0 : index
    %56 = vector.load %arg7[%c0_46, %c0_47] : memref<1x4xf32, #tpu.memory_space<vmem>>, vector<1x4xf32>
    %57 = vector.broadcast %56 : vector<1x4xf32> to vector<64x4xf32>
    %58 = arith.mulf %55, %57 : vector<64x4xf32>
    %c0_48 = arith.constant 0 : index
    %c0_49 = arith.constant 0 : index
    %59 = vector.load %arg8[%c0_48, %c0_49] : memref<1x4xf32, #tpu.memory_space<vmem>>, vector<1x4xf32>
    %60 = vector.broadcast %59 : vector<1x4xf32> to vector<64x4xf32>
    %61 = arith.addf %58, %60 : vector<64x4xf32>
    %cst_50 = arith.constant 0.000000e+00 : f32
    %62 = vector.broadcast %cst_50 : f32 to vector<64x4xf32>
    %63 = arith.maximumf %61, %62 : vector<64x4xf32>
    %64 = arith.truncf %63 : vector<64x4xf32> to vector<64x4xbf16>
    %c0_51 = arith.constant 0 : index
    %c0_52 = arith.constant 0 : index
    %65 = vector.load %arg4[%c0_51, %c0_52] : memref<4x16xbf16, #tpu.memory_space<vmem>>, vector<4x16xbf16>
    %cst_53 = arith.constant dense<0.000000e+00> : vector<64x16xf32>
    %66 = tpu.matmul %64, %65, %cst_53 {dimension_numbers = #tpu.dot_dimension_numbers<[1], [0], [0], [1], [0, 0, 1, 1], [], []>} : vector<64x4xbf16>, vector<4x16xbf16>, vector<64x16xf32> -> vector<64x16xf32>
    %c0_54 = arith.constant 0 : index
    %c0_55 = arith.constant 0 : index
    %67 = vector.load %arg9[%c0_54, %c0_55] : memref<1x16xf32, #tpu.memory_space<vmem>>, vector<1x16xf32>
    %68 = vector.broadcast %67 : vector<1x16xf32> to vector<64x16xf32>
    %69 = arith.mulf %66, %68 : vector<64x16xf32>
    %c0_56 = arith.constant 0 : index
    %c0_57 = arith.constant 0 : index
    %70 = vector.load %arg10[%c0_56, %c0_57] : memref<1x16xf32, #tpu.memory_space<vmem>>, vector<1x16xf32>
    %71 = vector.broadcast %70 : vector<1x16xf32> to vector<64x16xf32>
    %72 = arith.addf %69, %71 : vector<64x16xf32>
    %73 = arith.addf %72, %2 : vector<64x16xf32>
    %cst_58 = arith.constant 0.000000e+00 : f32
    %74 = vector.broadcast %cst_58 : f32 to vector<64x16xf32>
    %75 = arith.maximumf %73, %74 : vector<64x16xf32>
    %76 = vector.shape_cast %75 : vector<64x16xf32> to vector<8x8x16xf32>
    %c0_59 = arith.constant 0 : index
    %c0_60 = arith.constant 0 : index
    %c0_61 = arith.constant 0 : index
    %c0_62 = arith.constant 0 : index
    %77 = vector.load %arg11[%c0_59, %c0_60, %c0_61, %c0_62] : memref<1x8x8x16xf32, #tpu.memory_space<vmem>>, vector<1x8x8x16xf32>
    %78 = vector.shape_cast %77 : vector<1x8x8x16xf32> to vector<8x8x16xf32>
    %79 = vector.shape_cast %76 : vector<8x8x16xf32> to vector<1x8x8x16xf32>
    tpu.vector_store %arg11[%c0_59, %c0_60, %c0_61, %c0_62], %79 {strides = array<i32>} : memref<1x8x8x16xf32, #tpu.memory_space<vmem>>, vector<1x8x8x16xf32>,
    return
  }
  func.func @transform_0(%arg0: i32) -> (i32, i32, i32, i32) {
    %c0_i32 = arith.constant 0 : i32
    %c0_i32_0 = arith.constant 0 : i32
    %c0_i32_1 = arith.constant 0 : i32
    %c0_i32_2 = arith.constant 0 : i32
    return %arg0, %c0_i32, %c0_i32_0, %c0_i32_1 : i32, i32, i32, i32
  }
  func.func @transform_1(%arg0: i32) -> (i32, i32) {
    %c0_i32 = arith.constant 0 : i32
    %c0_i32_0 = arith.constant 0 : i32
    %c0_i32_1 = arith.constant 0 : i32
    return %c0_i32, %c0_i32_0 : i32, i32
  }
  func.func @transform_2(%arg0: i32) -> (i32, i32, i32) {
    %c0_i32 = arith.constant 0 : i32
    %c0_i32_0 = arith.constant 0 : i32
    %c0_i32_1 = arith.constant 0 : i32
    %c0_i32_2 = arith.constant 0 : i32
    return %c0_i32, %c0_i32_0, %c0_i32_1 : i32, i32, i32
  }
  func.func @transform_3(%arg0: i32) -> (i32, i32) {
    %c0_i32 = arith.constant 0 : i32
    %c0_i32_0 = arith.constant 0 : i32
    %c0_i32_1 = arith.constant 0 : i32
    return %c0_i32, %c0_i32_0 : i32, i32
  }
  func.func @transform_4(%arg0: i32) -> (i32, i32) {
    %c0_i32 = arith.constant 0 : i32
    %c0_i32_0 = arith.constant 0 : i32
    %c0_i32_1 = arith.constant 0 : i32
    return %c0_i32, %c0_i32_0 : i32, i32
  }
  func.func @transform_5(%arg0: i32) -> (i32, i32) {
    %c0_i32 = arith.constant 0 : i32
    %c0_i32_0 = arith.constant 0 : i32
    %c0_i32_1 = arith.constant 0 : i32
    return %c0_i32, %c0_i32_0 : i32, i32
  }
  func.func @transform_6(%arg0: i32) -> (i32, i32) {
    %c0_i32 = arith.constant 0 : i32
    %c0_i32_0 = arith.constant 0 : i32
    %c0_i32_1 = arith.constant 0 : i32
    return %c0_i32, %c0_i32_0 : i32, i32
  }
  func.func @transform_7(%arg0: i32) -> (i32, i32) {
    %c0_i32 = arith.constant 0 : i32
    %c0_i32_0 = arith.constant 0 : i32
    %c0_i32_1 = arith.constant 0 : i32
    return %c0_i32, %c0_i32_0 : i32, i32
  }
  func.func @transform_8(%arg0: i32) -> (i32, i32) {
    %c0_i32 = arith.constant 0 : i32
    %c0_i32_0 = arith.constant 0 : i32
    %c0_i32_1 = arith.constant 0 : i32
    return %c0_i32, %c0_i32_0 : i32, i32
  }
  func.func @transform_9(%arg0: i32) -> (i32, i32) {
    %c0_i32 = arith.constant 0 : i32
    %c0_i32_0 = arith.constant 0 : i32
    %c0_i32_1 = arith.constant 0 : i32
    return %c0_i32, %c0_i32_0 : i32, i32
  }
  func.func @transform_10(%arg0: i32) -> (i32, i32, i32, i32) {
    %c0_i32 = arith.constant 0 : i32
    %c0_i32_0 = arith.constant 0 : i32
    %c0_i32_1 = arith.constant 0 : i32
    %c0_i32_2 = arith.constant 0 : i32
    return %arg0, %c0_i32, %c0_i32_0, %c0_i32_1 : i32, i32, i32, i32
  }
}

</mosaic_0001>

<llo_original>
// kernel: tpu_custom_call.1
$region0: #{tpu_custom_call.1}
  #allocation0 [shape = 'u32[]', space=smem, size = 0x4, offset = 0x4, fixed_abs, tag = 'smem constant byte address 0x4 - core index']
  #allocation1 [shape = 'u32[144,128]{1,0:T(1,128)}', space=vmem, size = 0x12000, scoped, tag = 'internal scratch']
  #allocation2 [shape = 'f32[10,10,4]{2,1,0:T(8,128)}', space=vmem, size = 0x14000, scoped, tag = 'scratch operand']
  %s0 = inlined_call_operand.hbm [shape: f32[2,8,8,16], index: 0, kind: input, shape index: {}]
  %s1 = inlined_call_operand.vmem [shape: bf16[16,4], index: 1, kind: input, shape index: {}]
  %s2 = inlined_call_operand.vmem [shape: bf16[3,12,4], index: 2, kind: input, shape index: {}]
  %s3 = inlined_call_operand.vmem [shape: bf16[4,16], index: 3, kind: input, shape index: {}]
  %s4 = inlined_call_operand.vmem [shape: f32[1,4], index: 4, kind: input, shape index: {}]
  %s5 = inlined_call_operand.vmem [shape: f32[1,4], index: 5, kind: input, shape index: {}]
  %s6 = inlined_call_operand.vmem [shape: f32[1,4], index: 6, kind: input, shape index: {}]
  %s7 = inlined_call_operand.vmem [shape: f32[1,4], index: 7, kind: input, shape index: {}]
  %s8 = inlined_call_operand.vmem [shape: f32[1,16], index: 8, kind: input, shape index: {}]
  %s9 = inlined_call_operand.vmem [shape: f32[1,16], index: 9, kind: input, shape index: {}]
  %s10 = inlined_call_operand.hbm [shape: f32[2,8,8,16], index: 10, kind: output, shape index: {}]
  %s11 = sld [smem:[#allocation0]]
  $region77: #{tpu_custom_call.1} parent=0
    _
  %s13 = ssub.s32 1, %s11
  %s14 = scalar_select 0, %s13, %s11
  $region1: #{tpu_custom_call.1} parent=0
    #allocation3 [shape = 'u8[65536]{0}', space=vmem, size = 0x10000, scoped, tag = 'input window, operand 0']
    #allocation4 [shape = 's32[2]{0}', space=sflag, size = 0x8, scoped, tag = 'scoped memory for tpu_custom_call.1']
    #allocation5 [shape = 's32[2]{0}', space=sflag, size = 0x8, scoped, tag = 'scoped memory for tpu_custom_call.1']
    #allocation6 [shape = 'u8[65536]{0}', space=vmem, size = 0x10000, scoped, tag = 'output window, operand 0']
    %15 = vsyncpa [#allocation4], 0
    %s16 = scalar_lea.sflag [#allocation4], 1
    %17 = vsyncpa %s16, 0
    %18 = vsyncpa [#allocation5], 0
    %s19 = scalar_lea.sflag [#allocation5], 1
    %20 = vsyncpa %s19, 0
    loop: start=0, step=1, limit=4
    $region2: #{tpu_custom_call.1} parent=1 // loop_pre_header
      _
    $region3: #{tpu_custom_call.1} parent=1 // loop_header
      %s22 = sphi 0, %s26
      %p23 = scmp.ge.s32.totalorder %s22, 4
      %s32 = sphi 0, %s34
      %s35 = sphi 0, %s32
      %s36 = sphi 0, %s35
      %s52 = sphi 0, %s36
      %s56 = sphi 0, %s56
      %s58 = sphi 0, %s56
      %s59 = sphi 0, %s58
      %s73 = sphi 0, %s59
      %s77 = sphi 0, %s77
      %s79 = sphi 0, %s77
      %s80 = sphi 0, %s79
      %s94 = sphi 0, %s80
      %s98 = sphi 0, %s98
      %s100 = sphi 0, %s98
      %s101 = sphi 0, %s100
      %s115 = sphi 0, %s101
      %s119 = sphi 0, %s119
      %s121 = sphi 0, %s119
      %s122 = sphi 0, %s121
      %s136 = sphi 0, %s122
      %s140 = sphi 0, %s140
      %s142 = sphi 0, %s140
      %s143 = sphi 0, %s142
      %s157 = sphi 0, %s143
      %s161 = sphi 0, %s161
      %s163 = sphi 0, %s161
      %s164 = sphi 0, %s163
      %s178 = sphi 0, %s164
      %s182 = sphi 0, %s182
      %s184 = sphi 0, %s182
      %s185 = sphi 0, %s184
      %s199 = sphi 0, %s185
      %s203 = sphi 0, %s203
      %s205 = sphi 0, %s203
      %s206 = sphi 0, %s205
      %s220 = sphi 0, %s206
      %s224 = sphi 0, %s224
      %s226 = sphi 0, %s224
      %s227 = sphi 0, %s226
      %s241 = sphi 0, %s227
      %s247 = sphi 0, %s249
      %s250 = sphi 0, %s247
      %s251 = sphi 0, %s250
      %s267 = sphi 0, %s251
    $region4: #{tpu_custom_call.1} parent=1 // loop_header_branch
      %25 = sbr.rel (%p23) target = $region8
    $region5: #{tpu_custom_call.1} parent=1 // loop_body
      %s27 = ssub.s32 %s22, 1
      %s28 = ssub.s32 %s22, 2
      %s29 = sadd.s32 %s22, 1
      %s30 = ssub.s32 %s22, %s29
      %p31 = scmp.eq.s32.totalorder %s30, 0
      %s33 = sadd.s32 %s32, 1
      %s34 = scalar_select %p31, %s32, %s33
      %p37 = pneg %p31
      %p38 = scmp.eq.s32.totalorder %s22, 1
      %p39 = por %p37, %p38
      %p40 = scmp.ne.s32.totalorder %s32, %s35
      %p41 = scmp.eq.s32.totalorder %s22, 0
      %p42 = por %p40, %p41
      %p43 = scmp.ne.s32.totalorder %s32, %s35
      %p44 = scmp.eq.s32.totalorder %s27, 1
      %p45 = por %p43, %p44
      %p46 = scmp.ne.s32.totalorder %s35, %s36
      %p47 = scmp.eq.s32.totalorder %s27, 0
      %p48 = por %p46, %p47
      %p49 = scmp.ne.s32.totalorder %s35, %s36
      %p50 = scmp.eq.s32.totalorder %s28, 1
      %p51 = por %p49, %p50
      %p53 = scmp.ne.s32.totalorder %s36, %s52
      %p54 = scmp.eq.s32.totalorder %s28, 0
      %p55 = por %p53, %p54
      %s57 = sadd.s32 %s56, 1
      %p60 = scmp.eq.s32.totalorder %s22, 1
      %p61 = scmp.ne.s32.totalorder %s56, %s58
      %p62 = scmp.eq.s32.totalorder %s22, 0
      %p63 = por %p61, %p62
      %p64 = scmp.ne.s32.totalorder %s56, %s58
      %p65 = scmp.eq.s32.totalorder %s27, 1
      %p66 = por %p64, %p65
      %p67 = scmp.ne.s32.totalorder %s58, %s59
      %p68 = scmp.eq.s32.totalorder %s27, 0
      %p69 = por %p67, %p68
      %p70 = scmp.ne.s32.totalorder %s58, %s59
      %p71 = scmp.eq.s32.totalorder %s28, 1
      %p72 = por %p70, %p71
      %p74 = scmp.ne.s32.totalorder %s59, %s73
      %p75 = scmp.eq.s32.totalorder %s28, 0
      %p76 = por %p74, %p75
      %s78 = sadd.s32 %s77, 1
      %p81 = scmp.eq.s32.totalorder %s22, 1
      %p82 = scmp.ne.s32.totalorder %s77, %s79
      %p83 = scmp.eq.s32.totalorder %s22, 0
      %p84 = por %p82, %p83
      %p85 = scmp.ne.s32.totalorder %s77, %s79
      %p86 = scmp.eq.s32.totalorder %s27, 1
      %p87 = por %p85, %p86
      %p88 = scmp.ne.s32.totalorder %s79, %s80
      %p89 = scmp.eq.s32.totalorder %s27, 0
      %p90 = por %p88, %p89
      %p91 = scmp.ne.s32.totalorder %s79, %s80
      %p92 = scmp.eq.s32.totalorder %s28, 1
      %p93 = por %p91, %p92
      %p95 = scmp.ne.s32.totalorder %s80, %s94
      %p96 = scmp.eq.s32.totalorder %s28, 0
      %p97 = por %p95, %p96
      %s99 = sadd.s32 %s98, 1
      %p102 = scmp.eq.s32.totalorder %s22, 1
      %p103 = scmp.ne.s32.totalorder %s98, %s100
      %p104 = scmp.eq.s32.totalorder %s22, 0
      %p105 = por %p103, %p104
      %p106 = scmp.ne.s32.totalorder %s98, %s100
      %p107 = scmp.eq.s32.totalorder %s27, 1
      %p108 = por %p106, %p107
      %p109 = scmp.ne.s32.totalorder %s100, %s101
      %p110 = scmp.eq.s32.totalorder %s27, 0
      %p111 = por %p109, %p110
      %p112 = scmp.ne.s32.totalorder %s100, %s101
      %p113 = scmp.eq.s32.totalorder %s28, 1
      %p114 = por %p112, %p113
      %p116 = scmp.ne.s32.totalorder %s101, %s115
      %p117 = scmp.eq.s32.totalorder %s28, 0
      %p118 = por %p116, %p117
      %s120 = sadd.s32 %s119, 1
      %p123 = scmp.eq.s32.totalorder %s22, 1
      %p124 = scmp.ne.s32.totalorder %s119, %s121
      %p125 = scmp.eq.s32.totalorder %s22, 0
      %p126 = por %p124, %p125
      %p127 = scmp.ne.s32.totalorder %s119, %s121
      %p128 = scmp.eq.s32.totalorder %s27, 1
      %p129 = por %p127, %p128
      %p130 = scmp.ne.s32.totalorder %s121, %s122
      %p131 = scmp.eq.s32.totalorder %s27, 0
      %p132 = por %p130, %p131
      %p133 = scmp.ne.s32.totalorder %s121, %s122
      %p134 = scmp.eq.s32.totalorder %s28, 1
      %p135 = por %p133, %p134
      %p137 = scmp.ne.s32.totalorder %s122, %s136
      %p138 = scmp.eq.s32.totalorder %s28, 0
      %p139 = por %p137, %p138
      %s141 = sadd.s32 %s140, 1
      %p144 = scmp.eq.s32.totalorder %s22, 1
      %p145 = scmp.ne.s32.totalorder %s140, %s142
      %p146 = scmp.eq.s32.totalorder %s22, 0
      %p147 = por %p145, %p146
      %p148 = scmp.ne.s32.totalorder %s140, %s142
      %p149 = scmp.eq.s32.totalorder %s27, 1
      %p150 = por %p148, %p149
      %p151 = scmp.ne.s32.totalorder %s142, %s143
      %p152 = scmp.eq.s32.totalorder %s27, 0
      %p153 = por %p151, %p152
      %p154 = scmp.ne.s32.totalorder %s142, %s143
      %p155 = scmp.eq.s32.totalorder %s28, 1
      %p156 = por %p154, %p155
      %p158 = scmp.ne.s32.totalorder %s143, %s157
      %p159 = scmp.eq.s32.totalorder %s28, 0
      %p160 = por %p158, %p159
      %s162 = sadd.s32 %s161, 1
      %p165 = scmp.eq.s32.totalorder %s22, 1
      %p166 = scmp.ne.s32.totalorder %s161, %s163
      %p167 = scmp.eq.s32.totalorder %s22, 0
      %p168 = por %p166, %p167
      %p169 = scmp.ne.s32.totalorder %s161, %s163
      %p170 = scmp.eq.s32.totalorder %s27, 1
      %p171 = por %p169, %p170
      %p172 = scmp.ne.s32.totalorder %s163, %s164
      %p173 = scmp.eq.s32.totalorder %s27, 0
      %p174 = por %p172, %p173
      %p175 = scmp.ne.s32.totalorder %s163, %s164
      %p176 = scmp.eq.s32.totalorder %s28, 1
      %p177 = por %p175, %p176
      %p179 = scmp.ne.s32.totalorder %s164, %s178
      %p180 = scmp.eq.s32.totalorder %s28, 0
      %p181 = por %p179, %p180
      %s183 = sadd.s32 %s182, 1
      %p186 = scmp.eq.s32.totalorder %s22, 1
      %p187 = scmp.ne.s32.totalorder %s182, %s184
      %p188 = scmp.eq.s32.totalorder %s22, 0
      %p189 = por %p187, %p188
      %p190 = scmp.ne.s32.totalorder %s182, %s184
      %p191 = scmp.eq.s32.totalorder %s27, 1
      %p192 = por %p190, %p191
      %p193 = scmp.ne.s32.totalorder %s184, %s185
      %p194 = scmp.eq.s32.totalorder %s27, 0
      %p195 = por %p193, %p194
      %p196 = scmp.ne.s32.totalorder %s184, %s185
      %p197 = scmp.eq.s32.totalorder %s28, 1
      %p198 = por %p196, %p197
      %p200 = scmp.ne.s32.totalorder %s185, %s199
      %p201 = scmp.eq.s32.totalorder %s28, 0
      %p202 = por %p200, %p201
      %s204 = sadd.s32 %s203, 1
      %p207 = scmp.eq.s32.totalorder %s22, 1
      %p208 = scmp.ne.s32.totalorder %s203, %s205
      %p209 = scmp.eq.s32.totalorder %s22, 0
      %p210 = por %p208, %p209
      %p211 = scmp.ne.s32.totalorder %s203, %s205
      %p212 = scmp.eq.s32.totalorder %s27, 1
      %p213 = por %p211, %p212
      %p214 = scmp.ne.s32.totalorder %s205, %s206
      %p215 = scmp.eq.s32.totalorder %s27, 0
      %p216 = por %p214, %p215
      %p217 = scmp.ne.s32.totalorder %s205, %s206
      %p218 = scmp.eq.s32.totalorder %s28, 1
      %p219 = por %p217, %p218
      %p221 = scmp.ne.s32.totalorder %s206, %s220
      %p222 = scmp.eq.s32.totalorder %s28, 0
      %p223 = por %p221, %p222
      %s225 = sadd.s32 %s224, 1
      %p228 = scmp.eq.s32.totalorder %s22, 1
      %p229 = scmp.ne.s32.totalorder %s224, %s226
      %p230 = scmp.eq.s32.totalorder %s22, 0
      %p231 = por %p229, %p230
      %p232 = scmp.ne.s32.totalorder %s224, %s226
      %p233 = scmp.eq.s32.totalorder %s27, 1
      %p234 = por %p232, %p233
      %p235 = scmp.ne.s32.totalorder %s226, %s227
      %p236 = scmp.eq.s32.totalorder %s27, 0
      %p237 = por %p235, %p236
      %p238 = scmp.ne.s32.totalorder %s226, %s227
      %p239 = scmp.eq.s32.totalorder %s28, 1
      %p240 = por %p238, %p239
      %p242 = scmp.ne.s32.totalorder %s227, %s241
      %p243 = scmp.eq.s32.totalorder %s28, 0
      %p244 = por %p242, %p243
      %s245 = ssub.s32 %s22, %s29
      %p246 = scmp.eq.s32.totalorder %s245, 0
      %s248 = sadd.s32 %s247, 1
      %s249 = scalar_select %p246, %s247, %s248
      %p252 = pneg %p246
      %p253 = scmp.eq.s32.totalorder %s22, 1
      %p254 = por %p252, %p253
      %p255 = scmp.ne.s32.totalorder %s247, %s250
      %p256 = scmp.eq.s32.totalorder %s22, 0
      %p257 = por %p255, %p256
      %p258 = scmp.ne.s32.totalorder %s247, %s250
      %p259 = scmp.eq.s32.totalorder %s27, 1
      %p260 = por %p258, %p259
      %p261 = scmp.ne.s32.totalorder %s250, %s251
      %p262 = scmp.eq.s32.totalorder %s27, 0
      %p263 = por %p261, %p262
      %p264 = scmp.ne.s32.totalorder %s250, %s251
      %p265 = scmp.eq.s32.totalorder %s28, 1
      %p266 = por %p264, %p265
      %p268 = scmp.ne.s32.totalorder %s251, %s267
      %p269 = scmp.eq.s32.totalorder %s28, 0
      %p270 = por %p268, %p269
      %p271 = scmp.le.s32.totalorder 1, %s22
      %p272 = scmp.lt.s32.totalorder %s22, 3
      %p273 = pnand %p271, %p272
      %p274 = pneg %p273
      // Predicated region
      $region9: #{tpu_custom_call.1} parent=5 // pred_check
        _
      $region10: #{tpu_custom_call.1} parent=5 // pred_check_branch
        %276 = sbr.rel (%p273) target = $region12
      $region11: #{tpu_custom_call.1} parent=5 // pred_region
        %s277 = ssub.s32 %s22, 1
        // Predicated region
        $region13: #{tpu_custom_call.1} parent=11 // pred_check
          %p278 = pneg %p69
        $region14: #{tpu_custom_call.1} parent=11 // pred_check_branch
          %280 = sbr.rel (%p278) target = $region16
        $region15: #{tpu_custom_call.1} parent=11 // pred_region
          _
        $region16: #{tpu_custom_call.1} parent=11 // pred_fallthru
          _
        // Predicated region
        $region17: #{tpu_custom_call.1} parent=11 // pred_check
          %p281 = pneg %p90
        $region18: #{tpu_custom_call.1} parent=11 // pred_check_branch
          %283 = sbr.rel (%p281) target = $region20
        $region19: #{tpu_custom_call.1} parent=11 // pred_region
          _
        $region20: #{tpu_custom_call.1} parent=11 // pred_fallthru
          _
        // Predicated region
        $region21: #{tpu_custom_call.1} parent=11 // pred_check
          %p284 = pneg %p111
        $region22: #{tpu_custom_call.1} parent=11 // pred_check_branch
          %286 = sbr.rel (%p284) target = $region24
        $region23: #{tpu_custom_call.1} parent=11 // pred_region
          _
        $region24: #{tpu_custom_call.1} parent=11 // pred_fallthru
          _
        // Predicated region
        $region25: #{tpu_custom_call.1} parent=11 // pred_check
          %p287 = pneg %p132
        $region26: #{tpu_custom_call.1} parent=11 // pred_check_branch
          %289 = sbr.rel (%p287) target = $region28
        $region27: #{tpu_custom_call.1} parent=11 // pred_region
          _
        $region28: #{tpu_custom_call.1} parent=11 // pred_fallthru
          _
        // Predicated region
        $region29: #{tpu_custom_call.1} parent=11 // pred_check
          %p290 = pneg %p153
        $region30: #{tpu_custom_call.1} parent=11 // pred_check_branch
          %292 = sbr.rel (%p290) target = $region32
        $region31: #{tpu_custom_call.1} parent=11 // pred_region
          _
        $region32: #{tpu_custom_call.1} parent=11 // pred_fallthru
          _
        // Predicated region
        $region33: #{tpu_custom_call.1} parent=11 // pred_check
          %p293 = pneg %p174
        $region34: #{tpu_custom_call.1} parent=11 // pred_check_branch
          %295 = sbr.rel (%p293) target = $region36
        $region35: #{tpu_custom_call.1} parent=11 // pred_region
          _
        $region36: #{tpu_custom_call.1} parent=11 // pred_fallthru
          _
        // Predicated region
        $region37: #{tpu_custom_call.1} parent=11 // pred_check
          %p296 = pneg %p195
        $region38: #{tpu_custom_call.1} parent=11 // pred_check_branch
          %298 = sbr.rel (%p296) target = $region40
        $region39: #{tpu_custom_call.1} parent=11 // pred_region
          _
        $region40: #{tpu_custom_call.1} parent=11 // pred_fallthru
          _
        // Predicated region
        $region41: #{tpu_custom_call.1} parent=11 // pred_check
          %p299 = pneg %p216
        $region42: #{tpu_custom_call.1} parent=11 // pred_check_branch
          %301 = sbr.rel (%p299) target = $region44
        $region43: #{tpu_custom_call.1} parent=11 // pred_region
          _
        $region44: #{tpu_custom_call.1} parent=11 // pred_fallthru
          _
        // Predicated region
        $region45: #{tpu_custom_call.1} parent=11 // pred_check
          %p302 = pneg %p237
        $region46: #{tpu_custom_call.1} parent=11 // pred_check_branch
          %304 = sbr.rel (%p302) target = $region48
        $region47: #{tpu_custom_call.1} parent=11 // pred_region
          _
        $region48: #{tpu_custom_call.1} parent=11 // pred_fallthru
          _
      $region12: #{tpu_custom_call.1} parent=5 // pred_fallthru
        _
      %p305 = scmp.lt.s32.totalorder %s22, 2
      // Predicated region
      $region49: #{tpu_custom_call.1} parent=5 // pred_check
        %p306 = pneg %p305
      $region50: #{tpu_custom_call.1} parent=5 // pred_check_branch
        %308 = sbr.rel (%p306) target = $region52
      $region51: #{tpu_custom_call.1} parent=5 // pred_region
        // Predicated region
        $region53: #{tpu_custom_call.1} parent=51 // pred_check
          %p309 = pneg %p42
        $region54: #{tpu_custom_call.1} parent=51 // pred_check_branch
          %311 = sbr.rel (%p309) target = $region56
        $region55: #{tpu_custom_call.1} parent=51 // pred_region
          %s312 = sand.u32 %s32, 1
          %s313 = scalar_lea.sflag [#allocation4], %s312
          %s314 = sand.u32 %s32, 1
          %s315 = smul.addr %s314, 64
          %s316 = scalar_lea.vmem [#allocation3], %s315
          %s318 = ssub.s32 1024, 1024
          %319 = vsyncadd %s313, %s318
          %s320 = smul.addr %s22, 8
          %s321 = smul.addr %s320, 128
          %s322 = scalar_lea.hbm %s0, %s321
          %s323 = sshll.u32 %s316, 4
          %s324 = int_to_ptr.vmem [resolvable:$true] %s323
          %329 = dma.hbm_to_vmem [thread:$0]  %s322, 1024, %s324, %s313, 128, 128, 8
        $region56: #{tpu_custom_call.1} parent=51 // pred_fallthru
          _
      $region52: #{tpu_custom_call.1} parent=5 // pred_fallthru
        _
      %p330 = scmp.le.s32.totalorder 1, %s22
      %p331 = scmp.lt.s32.totalorder %s22, 3
      %p332 = pnand %p330, %p331
      %p333 = pneg %p332
      // Predicated region
      $region57: #{tpu_custom_call.1} parent=5 // pred_check
        _
      $region58: #{tpu_custom_call.1} parent=5 // pred_check_branch
        %335 = sbr.rel (%p332) target = $region60
      $region59: #{tpu_custom_call.1} parent=5 // pred_region
        %s336 = ssub.s32 %s22, 1
        %s337 = sand.u32 %s35, 1
        %s338 = scalar_lea.sflag [#allocation4], %s337
        %s339 = sand.u32 %s35, 1
        %s340 = smul.addr %s339, 64
        %s341 = scalar_lea.vmem [#allocation3], %s340
        // Predicated region
        $region61: #{tpu_custom_call.1} parent=59 // pred_check
          %p342 = pneg %p48
        $region62: #{tpu_custom_call.1} parent=59 // pred_check_branch
          %344 = sbr.rel (%p342) target = $region64
        $region63: #{tpu_custom_call.1} parent=59 // pred_region
          %345 = dma.done %s338, 1024
        $region64: #{tpu_custom_call.1} parent=59 // pred_fallthru
          _
        %s346 = sand.u32 %s35, 1
        %s347 = scalar_lea.sflag [#allocation4], %s346
        %s348 = sand.u32 %s35, 1
        %s349 = smul.addr %s348, 64
        %s350 = scalar_lea.vmem [#allocation3], %s349
        %p351 = pneg %p48
        %p352 = pneg %p45
        %p353 = pneg %p69
        %p354 = pneg %p66
        %p355 = pneg %p90
        %p356 = pneg %p87
        %p357 = pneg %p111
        %p358 = pneg %p108
        %p359 = pneg %p132
        %p360 = pneg %p129
        %p361 = pneg %p153
        %p362 = pneg %p150
        %p363 = pneg %p174
        %p364 = pneg %p171
        %p365 = pneg %p195
        %p366 = pneg %p192
        %p367 = pneg %p216
        %p368 = pneg %p213
        %p369 = pneg %p237
        %p370 = pneg %p234
        %p371 = pneg %p263
        %p372 = pneg %p260
        %s373 = sand.u32 %s250, 1
        %s374 = scalar_lea.sflag [#allocation5], %s373
        %s375 = sand.u32 %s250, 1
        %s376 = smul.addr %s375, 64
        %s377 = scalar_lea.vmem [#allocation6], %s376
        %v379 = vld [vmem:[%s341] sm:$0xff]
        %v380 = vld [vmem:[%s341 + $0x8] sm:$0xff]
        %v381 = vld [vmem:[%s341 + $0x10] sm:$0xff]
        %v382 = vld [vmem:[%s341 + $0x18] sm:$0xff]
        %v383 = vld [vmem:[%s341 + $0x20] sm:$0xff]
        %v384 = vld [vmem:[%s341 + $0x28] sm:$0xff]
        %v385 = vld [vmem:[%s341 + $0x30] sm:$0xff]
        %v386 = vld [vmem:[%s341 + $0x38] sm:$0xff]
        %v387 = vpack.c.bf16 %v380, %v379
        %v388 = vpack.c.bf16 %v382, %v381
        %v389 = vpack.c.bf16 %v384, %v383
        %v390 = vpack.c.bf16 %v386, %v385
        %v391 = vld [vmem:[%s1] sm:$0xf]
        %v392 = vld [vmem:[%s1 + $0x4] sm:$0xf]
        %v395 = vunpack.c.l.b16 %v391
        %v396 = vunpack.c.l.b16 %v392
        %v397 = vpack.c.b16 %v396, %v395
        %vm399 = vcmask 130048
        %v401 = vsel %vm399, %v387, 0
        %v404 = vsel %vm399, %v388, 0
        %v407 = vsel %vm399, %v389, 0
        %v410 = vsel %vm399, %v390, 0
        %412 = vmatprep.subr.bf16.mxu0 0
        %413 = vmatpush1.bf16.msra.mxu0 %v397
        %414 = vmatprep.subr.bf16.mxu0 0
        %415 = vmatpush1.bf16.msra.mxu0 0
        %416 = vmatprep.subr.bf16.mxu0 0
        %417 = vmatpush1.bf16.msra.mxu0 0
        %418 = vmatprep.subr.bf16.mxu0 0
        %419 = vmatpush1.bf16.msra.mxu0 0
        %420 = vmatprep.subr.bf16.mxu0 0
        %421 = vmatpush1.bf16.msra.mxu0 0
        %422 = vmatprep.subr.bf16.mxu0 0
        %423 = vmatpush1.bf16.msra.mxu0 0
        %424 = vmatprep.subr.bf16.mxu0 0
        %425 = vmatpush1.bf16.msra.mxu0 0
        %426 = vmatprep.subr.bf16.mxu0 0
        %427 = vmatpush1.bf16.msra.mxu0 0
        %428 = vmatprep.subr.bf16.mxu0 0
        %429 = vmatpush1.bf16.msra.mxu0 0
        %430 = vmatprep.subr.bf16.mxu0 0
        %431 = vmatpush1.bf16.msra.mxu0 0
        %432 = vmatprep.subr.bf16.mxu0 0
        %433 = vmatpush1.bf16.msra.mxu0 0
        %434 = vmatprep.subr.bf16.mxu0 0
        %435 = vmatpush1.bf16.msra.mxu0 0
        %436 = vmatprep.subr.bf16.mxu0 0
        %437 = vmatpush1.bf16.msra.mxu0 0
        %438 = vmatprep.subr.bf16.mxu0 0
        %439 = vmatpush1.bf16.msra.mxu0 0
        %440 = vmatprep.subr.bf16.mxu0 0
        %441 = vmatpush1.bf16.msra.mxu0 0
        %442 = vmatprep.subr.bf16.mxu0 0
        %443 = vmatpush1.bf16.msra.mxu0 0
        %444 = vmatprep.mubr.bf16.mxu0 0
        %445 = vmatmul.mubr.bf16.gmra.mrb[0].mxu0 %v401
        %v446 = vpop.f32.mrb[0].mxu0
        %v447 = vadd.f32 0.0, %v446
        %v448 = vpop.f32.mrb[0].mxu0
        %v449 = vpop.f32.mrb[0].mxu0
        %v450 = vadd.f32 0.0, %v449
        %v451 = vpop.f32.mrb[0].mxu0
        %452 = vmatprep.mubr.bf16.mxu0 0
        %453 = vmatmul.mubr.bf16.gmra.mrb[0].mxu0 %v404
        %v454 = vpop.f32.mrb[0].mxu0
        %v455 = vadd.f32 0.0, %v454
        %v456 = vpop.f32.mrb[0].mxu0
        %v457 = vpop.f32.mrb[0].mxu0
        %v458 = vadd.f32 0.0, %v457
        %v459 = vpop.f32.mrb[0].mxu0
        %460 = vmatprep.mubr.bf16.mxu0 0
        %461 = vmatmul.mubr.bf16.gmra.mrb[0].mxu0 %v407
        %v462 = vpop.f32.mrb[0].mxu0
        %v463 = vadd.f32 0.0, %v462
        %v464 = vpop.f32.mrb[0].mxu0
        %v465 = vpop.f32.mrb[0].mxu0
        %v466 = vadd.f32 0.0, %v465
        %v467 = vpop.f32.mrb[0].mxu0
        %468 = vmatprep.mubr.bf16.mxu0 0
        %469 = vmatmul.mubr.bf16.gmra.mrb[0].mxu0 %v410
        %v470 = vpop.f32.mrb[0].mxu0
        %v471 = vadd.f32 0.0, %v470
        %v472 = vpop.f32.mrb[0].mxu0
        %v473 = vpop.f32.mrb[0].mxu0
        %v474 = vadd.f32 0.0, %v473
        %v475 = vpop.f32.mrb[0].mxu0
        %476 = vdwg.mxu0
        %v477 = vld [vmem:[%s4] sm:$0x1]
        %v479 = vlaneseq
        %v480 = vshrl.u32 %v479, 7
        %v481 = vsub.s32 0, %v480
        %v482 = vrot.slane %v477, %v481
        %v484 = vmul.f32 %v447, %v482
        %v485 = vmul.f32 %v450, %v482
        %v486 = vmul.f32 %v455, %v482
        %v487 = vmul.f32 %v458, %v482
        %v488 = vmul.f32 %v463, %v482
        %v489 = vmul.f32 %v466, %v482
        %v490 = vmul.f32 %v471, %v482
        %v491 = vmul.f32 %v474, %v482
        %v492 = vld [vmem:[%s5] sm:$0x1]
        %v494 = vlaneseq
        %v495 = vshrl.u32 %v494, 7
        %v496 = vsub.s32 0, %v495
        %v497 = vrot.slane %v492, %v496
        %v499 = vadd.f32 %v484, %v497
        %v500 = vadd.f32 %v485, %v497
        %v501 = vadd.f32 %v486, %v497
        %v502 = vadd.f32 %v487, %v497
        %v503 = vadd.f32 %v488, %v497
        %v504 = vadd.f32 %v489, %v497
        %v505 = vadd.f32 %v490, %v497
        %v506 = vadd.f32 %v491, %v497
        %v507 = vmax.f32 %v499, 0.0
        %v508 = vmax.f32 %v500, 0.0
        %v509 = vmax.f32 %v501, 0.0
        %v510 = vmax.f32 %v502, 0.0
        %v511 = vmax.f32 %v503, 0.0
        %v512 = vmax.f32 %v504, 0.0
        %v513 = vmax.f32 %v505, 0.0
        %v514 = vmax.f32 %v506, 0.0
        %vm515 = vcmask 31744
        %516 = vst.msk [vmem:[#allocation2] sm:$0xff] %vm515, 0.0
        %vm517 = vcmask 25600
        %518 = vst.msk [vmem:[#allocation2 + $0x8] sm:$0x3] %vm517, 0.0
        %s519 = scalar_lea.vmem [#allocation2], 144
        %520 = vst.msk [vmem:[%s519] sm:$0xff] %vm515, 0.0
        %521 = vst.msk [vmem:[%s519 + $0x8] sm:$0x3] %vm517, 0.0
        %vm522 = vcmask 24576
        %523 = vst.msk [vmem:[#allocation2] sm:$0x1] %vm522, 0.0
        %524 = vst.msk [vmem:[#allocation2 + $0x10] sm:$0x1] %vm522, 0.0
        %525 = vst.msk [vmem:[#allocation2 + $0x20] sm:$0x1] %vm522, 0.0
        %526 = vst.msk [vmem:[#allocation2 + $0x30] sm:$0x1] %vm522, 0.0
        %527 = vst.msk [vmem:[#allocation2 + $0x40] sm:$0x1] %vm522, 0.0
        %528 = vst.msk [vmem:[#allocation2 + $0x50] sm:$0x1] %vm522, 0.0
        %529 = vst.msk [vmem:[#allocation2 + $0x60] sm:$0x1] %vm522, 0.0
        %530 = vst.msk [vmem:[#allocation2 + $0x70] sm:$0x1] %vm522, 0.0
        %531 = vst.msk [vmem:[#allocation2 + $0x80] sm:$0x1] %vm522, 0.0
        %532 = vst.msk [vmem:[#allocation2 + $0x90] sm:$0x1] %vm522, 0.0
        %533 = vst.msk [vmem:[#allocation2 + $0x9] sm:$0x1] %vm522, 0.0
        %534 = vst.msk [vmem:[#allocation2 + $0x19] sm:$0x1] %vm522, 0.0
        %535 = vst.msk [vmem:[#allocation2 + $0x29] sm:$0x1] %vm522, 0.0
        %536 = vst.msk [vmem:[#allocation2 + $0x39] sm:$0x1] %vm522, 0.0
        %537 = vst.msk [vmem:[#allocation2 + $0x49] sm:$0x1] %vm522, 0.0
        %538 = vst.msk [vmem:[#allocation2 + $0x59] sm:$0x1] %vm522, 0.0
        %539 = vst.msk [vmem:[#allocation2 + $0x69] sm:$0x1] %vm522, 0.0
        %540 = vst.msk [vmem:[#allocation2 + $0x79] sm:$0x1] %vm522, 0.0
        %541 = vst.msk [vmem:[#allocation2 + $0x89] sm:$0x1] %vm522, 0.0
        %542 = vst.msk [vmem:[#allocation2 + $0x99] sm:$0x1] %vm522, 0.0
        %s543 = scalar_lea.vmem [#allocation2], 16
        %544 = vst.msk [vmem:[%s543 + $0x1] sm:$0xff] %vm515, %v507
        %545 = vst.msk [vmem:[%s543 + $0x11] sm:$0xff] %vm515, %v508
        %546 = vst.msk [vmem:[%s543 + $0x21] sm:$0xff] %vm515, %v509
        %547 = vst.msk [vmem:[%s543 + $0x31] sm:$0xff] %vm515, %v510
        %548 = vst.msk [vmem:[%s543 + $0x41] sm:$0xff] %vm515, %v511
        %549 = vst.msk [vmem:[%s543 + $0x51] sm:$0xff] %vm515, %v512
        %550 = vst.msk [vmem:[%s543 + $0x61] sm:$0xff] %vm515, %v513
        %551 = vst.msk [vmem:[%s543 + $0x71] sm:$0xff] %vm515, %v514
        %v552 = vld [vmem:[#allocation2] sm:$0xff]
        %v553 = vld [vmem:[#allocation2 + $0x8] sm:$0x3]
        %v554 = vld [vmem:[#allocation2 + $0x10] sm:$0xff]
        %v555 = vld [vmem:[#allocation2 + $0x18] sm:$0x3]
        %v556 = vld [vmem:[#allocation2 + $0x20] sm:$0xff]
        %v557 = vld [vmem:[#allocation2 + $0x28] sm:$0x3]
        %v558 = vld [vmem:[#allocation2 + $0x30] sm:$0xff]
        %v559 = vld [vmem:[#allocation2 + $0x38] sm:$0x3]
        %v560 = vld [vmem:[#allocation2 + $0x40] sm:$0xff]
        %v561 = vld [vmem:[#allocation2 + $0x48] sm:$0x3]
        %v562 = vld [vmem:[#allocation2 + $0x50] sm:$0xff]
        %v563 = vld [vmem:[#allocation2 + $0x58] sm:$0x3]
        %v564 = vld [vmem:[#allocation2 + $0x60] sm:$0xff]
        %v565 = vld [vmem:[#allocation2 + $0x68] sm:$0x3]
        %v566 = vld [vmem:[#allocation2 + $0x70] sm:$0xff]
        %v567 = vld [vmem:[#allocation2 + $0x78] sm:$0x3]
        %vm584 = vcmask 1046528
        %v585 = vrot.slane %v552, 1
        %v586 = vrot.slane %v553, 1
        %v587 = vsel %vm584, %v585, %v586
        %v588 = vrot.slane %v554, 1
        %v589 = vrot.slane %v555, 1
        %v590 = vsel %vm584, %v588, %v589
        %v591 = vrot.slane %v556, 1
        %v592 = vrot.slane %v557, 1
        %v593 = vsel %vm584, %v591, %v592
        %v594 = vrot.slane %v558, 1
        %v595 = vrot.slane %v559, 1
        %v596 = vsel %vm584, %v594, %v595
        %v597 = vrot.slane %v560, 1
        %v598 = vrot.slane %v561, 1
        %v599 = vsel %vm584, %v597, %v598
        %v600 = vrot.slane %v562, 1
        %v601 = vrot.slane %v563, 1
        %v602 = vsel %vm584, %v600, %v601
        %v603 = vrot.slane %v564, 1
        %v604 = vrot.slane %v565, 1
        %v605 = vsel %vm584, %v603, %v604
        %v606 = vrot.slane %v566, 1
        %v607 = vrot.slane %v567, 1
        %v608 = vsel %vm584, %v606, %v607
        %609 = vrot.lane.b32.xlu0 %v587, 4
        %v610 = vpop.permute.xlu0 %609
        %611 = vrot.lane.b32.xlu0 %v590, 4
        %v612 = vpop.permute.xlu0 %611
        %613 = vrot.lane.b32.xlu0 %v593, 4
        %v614 = vpop.permute.xlu0 %613
        %615 = vrot.lane.b32.xlu0 %v596, 4
        %v616 = vpop.permute.xlu0 %615
        %617 = vrot.lane.b32.xlu0 %v599, 4
        %v618 = vpop.permute.xlu0 %617
        %619 = vrot.lane.b32.xlu0 %v602, 4
        %v620 = vpop.permute.xlu0 %619
        %621 = vrot.lane.b32.xlu0 %v605, 4
        %v622 = vpop.permute.xlu0 %621
        %623 = vrot.lane.b32.xlu0 %v608, 4
        %v624 = vpop.permute.xlu0 %623
        %vm633 = vcmask 1045504
        %v634 = vrot.slane %v552, 2
        %v635 = vrot.slane %v553, 2
        %v636 = vsel %vm633, %v634, %v635
        %v637 = vrot.slane %v554, 2
        %v638 = vrot.slane %v555, 2
        %v639 = vsel %vm633, %v637, %v638
        %v640 = vrot.slane %v556, 2
        %v641 = vrot.slane %v557, 2
        %v642 = vsel %vm633, %v640, %v641
        %v643 = vrot.slane %v558, 2
        %v644 = vrot.slane %v559, 2
        %v645 = vsel %vm633, %v643, %v644
        %v646 = vrot.slane %v560, 2
        %v647 = vrot.slane %v561, 2
        %v648 = vsel %vm633, %v646, %v647
        %v649 = vrot.slane %v562, 2
        %v650 = vrot.slane %v563, 2
        %v651 = vsel %vm633, %v649, %v650
        %v652 = vrot.slane %v564, 2
        %v653 = vrot.slane %v565, 2
        %v654 = vsel %vm633, %v652, %v653
        %v655 = vrot.slane %v566, 2
        %v656 = vrot.slane %v567, 2
        %v657 = vsel %vm633, %v655, %v656
        %658 = vrot.lane.b32.xlu0 %v636, 8
        %v659 = vpop.permute.xlu0 %658
        %660 = vrot.lane.b32.xlu0 %v639, 8
        %v661 = vpop.permute.xlu0 %660
        %662 = vrot.lane.b32.xlu0 %v642, 8
        %v663 = vpop.permute.xlu0 %662
        %664 = vrot.lane.b32.xlu0 %v645, 8
        %v665 = vpop.permute.xlu0 %664
        %666 = vrot.lane.b32.xlu0 %v648, 8
        %v667 = vpop.permute.xlu0 %666
        %668 = vrot.lane.b32.xlu0 %v651, 8
        %v669 = vpop.permute.xlu0 %668
        %670 = vrot.lane.b32.xlu0 %v654, 8
        %v671 = vpop.permute.xlu0 %670
        %672 = vrot.lane.b32.xlu0 %v657, 8
        %v673 = vpop.permute.xlu0 %672
        %v682 = vsel %vm515, %v552, %v610
        %v683 = vsel %vm515, %v554, %v612
        %v684 = vsel %vm515, %v556, %v614
        %v685 = vsel %vm515, %v558, %v616
        %v686 = vsel %vm515, %v560, %v618
        %v687 = vsel %vm515, %v562, %v620
        %v688 = vsel %vm515, %v564, %v622
        %v689 = vsel %vm515, %v566, %v624
        %vm690 = vcmask 64512
        %v691 = vsel %vm690, %v682, %v659
        %v692 = vsel %vm690, %v683, %v661
        %v693 = vsel %vm690, %v684, %v663
        %v694 = vsel %vm690, %v685, %v665
        %v695 = vsel %vm690, %v686, %v667
        %v696 = vsel %vm690, %v687, %v669
        %v697 = vsel %vm690, %v688, %v671
        %v698 = vsel %vm690, %v689, %v673
        %v699 = vpack.c.bf16 %v692, %v691
        %v700 = vpack.c.bf16 %v694, %v693
        %v701 = vpack.c.bf16 %v696, %v695
        %v702 = vpack.c.bf16 %v698, %v697
        %v703 = vld [vmem:[%s2] sm:$0xf]
        %v704 = vld [vmem:[%s2 + $0x4] sm:$0x3]
        %v705 = vld [vmem:[%s543] sm:$0xff]
        %v706 = vld [vmem:[%s543 + $0x8] sm:$0x3]
        %v707 = vld [vmem:[%s543 + $0x10] sm:$0xff]
        %v708 = vld [vmem:[%s543 + $0x18] sm:$0x3]
        %v709 = vld [vmem:[%s543 + $0x20] sm:$0xff]
        %v710 = vld [vmem:[%s543 + $0x28] sm:$0x3]
        %v711 = vld [vmem:[%s543 + $0x30] sm:$0xff]
        %v712 = vld [vmem:[%s543 + $0x38] sm:$0x3]
        %v713 = vld [vmem:[%s543 + $0x40] sm:$0xff]
        %v714 = vld [vmem:[%s543 + $0x48] sm:$0x3]
        %v715 = vld [vmem:[%s543 + $0x50] sm:$0xff]
        %v716 = vld [vmem:[%s543 + $0x58] sm:$0x3]
        %v717 = vld [vmem:[%s543 + $0x60] sm:$0xff]
        %v718 = vld [vmem:[%s543 + $0x68] sm:$0x3]
        %v719 = vld [vmem:[%s543 + $0x70] sm:$0xff]
        %v720 = vld [vmem:[%s543 + $0x78] sm:$0x3]
        %v737 = vrot.slane %v705, 1
        %v738 = vrot.slane %v706, 1
        %v739 = vsel %vm584, %v737, %v738
        %v740 = vrot.slane %v707, 1
        %v741 = vrot.slane %v708, 1
        %v742 = vsel %vm584, %v740, %v741
        %v743 = vrot.slane %v709, 1
        %v744 = vrot.slane %v710, 1
        %v745 = vsel %vm584, %v743, %v744
        %v746 = vrot.slane %v711, 1
        %v747 = vrot.slane %v712, 1
        %v748 = vsel %vm584, %v746, %v747
        %v749 = vrot.slane %v713, 1
        %v750 = vrot.slane %v714, 1
        %v751 = vsel %vm584, %v749, %v750
        %v752 = vrot.slane %v715, 1
        %v753 = vrot.slane %v716, 1
        %v754 = vsel %vm584, %v752, %v753
        %v755 = vrot.slane %v717, 1
        %v756 = vrot.slane %v718, 1
        %v757 = vsel %vm584, %v755, %v756
        %v758 = vrot.slane %v719, 1
        %v759 = vrot.slane %v720, 1
        %v760 = vsel %vm584, %v758, %v759
        %761 = vrot.lane.b32.xlu0 %v739, 4
        %v762 = vpop.permute.xlu0 %761
        %763 = vrot.lane.b32.xlu0 %v742, 4
        %v764 = vpop.permute.xlu0 %763
        %765 = vrot.lane.b32.xlu0 %v745, 4
        %v766 = vpop.permute.xlu0 %765
        %767 = vrot.lane.b32.xlu0 %v748, 4
        %v768 = vpop.permute.xlu0 %767
        %769 = vrot.lane.b32.xlu0 %v751, 4
        %v770 = vpop.permute.xlu0 %769
        %771 = vrot.lane.b32.xlu0 %v754, 4
        %v772 = vpop.permute.xlu0 %771
        %773 = vrot.lane.b32.xlu0 %v757, 4
        %v774 = vpop.permute.xlu0 %773
        %775 = vrot.lane.b32.xlu0 %v760, 4
        %v776 = vpop.permute.xlu0 %775
        %v785 = vrot.slane %v705, 2
        %v786 = vrot.slane %v706, 2
        %v787 = vsel %vm633, %v785, %v786
        %v788 = vrot.slane %v707, 2
        %v789 = vrot.slane %v708, 2
        %v790 = vsel %vm633, %v788, %v789
        %v791 = vrot.slane %v709, 2
        %v792 = vrot.slane %v710, 2
        %v793 = vsel %vm633, %v791, %v792
        %v794 = vrot.slane %v711, 2
        %v795 = vrot.slane %v712, 2
        %v796 = vsel %vm633, %v794, %v795
        %v797 = vrot.slane %v713, 2
        %v798 = vrot.slane %v714, 2
        %v799 = vsel %vm633, %v797, %v798
        %v800 = vrot.slane %v715, 2
        %v801 = vrot.slane %v716, 2
        %v802 = vsel %vm633, %v800, %v801
        %v803 = vrot.slane %v717, 2
        %v804 = vrot.slane %v718, 2
        %v805 = vsel %vm633, %v803, %v804
        %v806 = vrot.slane %v719, 2
        %v807 = vrot.slane %v720, 2
        %v808 = vsel %vm633, %v806, %v807
        %809 = vrot.lane.b32.xlu0 %v787, 8
        %v810 = vpop.permute.xlu0 %809
        %811 = vrot.lane.b32.xlu0 %v790, 8
        %v812 = vpop.permute.xlu0 %811
        %813 = vrot.lane.b32.xlu0 %v793, 8
        %v814 = vpop.permute.xlu0 %813
        %815 = vrot.lane.b32.xlu0 %v796, 8
        %v816 = vpop.permute.xlu0 %815
        %817 = vrot.lane.b32.xlu0 %v799, 8
        %v818 = vpop.permute.xlu0 %817
        %819 = vrot.lane.b32.xlu0 %v802, 8
        %v820 = vpop.permute.xlu0 %819
        %821 = vrot.lane.b32.xlu0 %v805, 8
        %v822 = vpop.permute.xlu0 %821
        %823 = vrot.lane.b32.xlu0 %v808, 8
        %v824 = vpop.permute.xlu0 %823
        %v833 = vsel %vm515, %v705, %v762
        %v834 = vsel %vm515, %v707, %v764
        %v835 = vsel %vm515, %v709, %v766
        %v836 = vsel %vm515, %v711, %v768
        %v837 = vsel %vm515, %v713, %v770
        %v838 = vsel %vm515, %v715, %v772
        %v839 = vsel %vm515, %v717, %v774
        %v840 = vsel %vm515, %v719, %v776
        %v841 = vsel %vm690, %v833, %v810
        %v842 = vsel %vm690, %v834, %v812
        %v843 = vsel %vm690, %v835, %v814
        %v844 = vsel %vm690, %v836, %v816
        %v845 = vsel %vm690, %v837, %v818
        %v846 = vsel %vm690, %v838, %v820
        %v847 = vsel %vm690, %v839, %v822
        %v848 = vsel %vm690, %v840, %v824
        %v849 = vpack.c.bf16 %v842, %v841
        %v850 = vpack.c.bf16 %v844, %v843
        %v851 = vpack.c.bf16 %v846, %v845
        %v852 = vpack.c.bf16 %v848, %v847
        %s853 = scalar_lea.vmem %s2, 8
        %v854 = vld [vmem:[%s853] sm:$0xf]
        %v855 = vld [vmem:[%s853 + $0x4] sm:$0x3]
        %v858 = vunpack.c.l.b16 %v854
        %v859 = vunpack.c.l.b16 %v855
        %v860 = vpack.c.b16 %v859, %v858
        %vm861 = vcmask 97280
        %v863 = vsel %vm861, %v849, 0
        %v866 = vsel %vm861, %v850, 0
        %v869 = vsel %vm861, %v851, 0
        %v872 = vsel %vm861, %v852, 0
        %v875 = vsel %vm633, %v860, 0
        %877 = vmatprep.subr.bf16.mxu0 0
        %878 = vmatpush1.bf16.msra.mxu0 %v875
        %879 = vmatprep.subr.bf16.mxu0 0
        %880 = vmatpush1.bf16.msra.mxu0 0
        %881 = vmatprep.subr.bf16.mxu0 0
        %882 = vmatpush1.bf16.msra.mxu0 0
        %883 = vmatprep.subr.bf16.mxu0 0
        %884 = vmatpush1.bf16.msra.mxu0 0
        %885 = vmatprep.subr.bf16.mxu0 0
        %886 = vmatpush1.bf16.msra.mxu0 0
        %887 = vmatprep.subr.bf16.mxu0 0
        %888 = vmatpush1.bf16.msra.mxu0 0
        %889 = vmatprep.subr.bf16.mxu0 0
        %890 = vmatpush1.bf16.msra.mxu0 0
        %891 = vmatprep.subr.bf16.mxu0 0
        %892 = vmatpush1.bf16.msra.mxu0 0
        %893 = vmatprep.subr.bf16.mxu0 0
        %894 = vmatpush1.bf16.msra.mxu0 0
        %895 = vmatprep.subr.bf16.mxu0 0
        %896 = vmatpush1.bf16.msra.mxu0 0
        %897 = vmatprep.subr.bf16.mxu0 0
        %898 = vmatpush1.bf16.msra.mxu0 0
        %899 = vmatprep.subr.bf16.mxu0 0
        %900 = vmatpush1.bf16.msra.mxu0 0
        %901 = vmatprep.subr.bf16.mxu0 0
        %902 = vmatpush1.bf16.msra.mxu0 0
        %903 = vmatprep.subr.bf16.mxu0 0
        %904 = vmatpush1.bf16.msra.mxu0 0
        %905 = vmatprep.subr.bf16.mxu0 0
        %906 = vmatpush1.bf16.msra.mxu0 0
        %907 = vmatprep.subr.bf16.mxu0 0
        %908 = vmatpush1.bf16.msra.mxu0 0
        %909 = vmatprep.mubr.bf16.mxu0 0
        %910 = vmatmul.mubr.bf16.gmra.mrb[0].mxu0 %v863
        %v911 = vpop.f32.mrb[0].mxu0
        %v912 = vadd.f32 0.0, %v911
        %v913 = vpop.f32.mrb[0].mxu0
        %v914 = vpop.f32.mrb[0].mxu0
        %v915 = vadd.f32 0.0, %v914
        %v916 = vpop.f32.mrb[0].mxu0
        %917 = vmatprep.mubr.bf16.mxu0 0
        %918 = vmatmul.mubr.bf16.gmra.mrb[0].mxu0 %v866
        %v919 = vpop.f32.mrb[0].mxu0
        %v920 = vadd.f32 0.0, %v919
        %v921 = vpop.f32.mrb[0].mxu0
        %v922 = vpop.f32.mrb[0].mxu0
        %v923 = vadd.f32 0.0, %v922
        %v924 = vpop.f32.mrb[0].mxu0
        %925 = vmatprep.mubr.bf16.mxu0 0
        %926 = vmatmul.mubr.bf16.gmra.mrb[0].mxu0 %v869
        %v927 = vpop.f32.mrb[0].mxu0
        %v928 = vadd.f32 0.0, %v927
        %v929 = vpop.f32.mrb[0].mxu0
        %v930 = vpop.f32.mrb[0].mxu0
        %v931 = vadd.f32 0.0, %v930
        %v932 = vpop.f32.mrb[0].mxu0
        %933 = vmatprep.mubr.bf16.mxu0 0
        %934 = vmatmul.mubr.bf16.gmra.mrb[0].mxu0 %v872
        %v935 = vpop.f32.mrb[0].mxu0
        %v936 = vadd.f32 0.0, %v935
        %v937 = vpop.f32.mrb[0].mxu0
        %v938 = vpop.f32.mrb[0].mxu0
        %v939 = vadd.f32 0.0, %v938
        %v940 = vpop.f32.mrb[0].mxu0
        %941 = vdwg.mxu0
        %v944 = vunpack.c.l.b16 %v703
        %v945 = vunpack.c.l.b16 %v704
        %v946 = vpack.c.b16 %v945, %v944
        %v948 = vsel %vm861, %v699, 0
        %v951 = vsel %vm861, %v700, 0
        %v954 = vsel %vm861, %v701, 0
        %v957 = vsel %vm861, %v702, 0
        %v960 = vsel %vm633, %v946, 0
        %962 = vmatprep.subr.bf16.mxu0 0
        %963 = vmatpush1.bf16.msra.mxu0 %v960
        %964 = vmatprep.subr.bf16.mxu0 0
        %965 = vmatpush1.bf16.msra.mxu0 0
        %966 = vmatprep.subr.bf16.mxu0 0
        %967 = vmatpush1.bf16.msra.mxu0 0
        %968 = vmatprep.subr.bf16.mxu0 0
        %969 = vmatpush1.bf16.msra.mxu0 0
        %970 = vmatprep.subr.bf16.mxu0 0
        %971 = vmatpush1.bf16.msra.mxu0 0
        %972 = vmatprep.subr.bf16.mxu0 0
        %973 = vmatpush1.bf16.msra.mxu0 0
        %974 = vmatprep.subr.bf16.mxu0 0
        %975 = vmatpush1.bf16.msra.mxu0 0
        %976 = vmatprep.subr.bf16.mxu0 0
        %977 = vmatpush1.bf16.msra.mxu0 0
        %978 = vmatprep.subr.bf16.mxu0 0
        %979 = vmatpush1.bf16.msra.mxu0 0
        %980 = vmatprep.subr.bf16.mxu0 0
        %981 = vmatpush1.bf16.msra.mxu0 0
        %982 = vmatprep.subr.bf16.mxu0 0
        %983 = vmatpush1.bf16.msra.mxu0 0
        %984 = vmatprep.subr.bf16.mxu0 0
        %985 = vmatpush1.bf16.msra.mxu0 0
        %986 = vmatprep.subr.bf16.mxu0 0
        %987 = vmatpush1.bf16.msra.mxu0 0
        %988 = vmatprep.subr.bf16.mxu0 0
        %989 = vmatpush1.bf16.msra.mxu0 0
        %990 = vmatprep.subr.bf16.mxu0 0
        %991 = vmatpush1.bf16.msra.mxu0 0
        %992 = vmatprep.subr.bf16.mxu0 0
        %993 = vmatpush1.bf16.msra.mxu0 0
        %994 = vmatprep.mubr.bf16.mxu0 0
        %995 = vmatmul.mubr.bf16.gmra.mrb[0].mxu0 %v948
        %v996 = vpop.f32.mrb[0].mxu0
        %v997 = vadd.f32 %v912, %v996
        %v998 = vpop.f32.mrb[0].mxu0
        %v999 = vpop.f32.mrb[0].mxu0
        %v1000 = vadd.f32 %v915, %v999
        %v1001 = vpop.f32.mrb[0].mxu0
        %1002 = vmatprep.mubr.bf16.mxu0 0
        %1003 = vmatmul.mubr.bf16.gmra.mrb[0].mxu0 %v951
        %v1004 = vpop.f32.mrb[0].mxu0
        %v1005 = vadd.f32 %v920, %v1004
        %v1006 = vpop.f32.mrb[0].mxu0
        %v1007 = vpop.f32.mrb[0].mxu0
        %v1008 = vadd.f32 %v923, %v1007
        %v1009 = vpop.f32.mrb[0].mxu0
        %1010 = vmatprep.mubr.bf16.mxu0 0
        %1011 = vmatmul.mubr.bf16.gmra.mrb[0].mxu0 %v954
        %v1012 = vpop.f32.mrb[0].mxu0
        %v1013 = vadd.f32 %v928, %v1012
        %v1014 = vpop.f32.mrb[0].mxu0
        %v1015 = vpop.f32.mrb[0].mxu0
        %v1016 = vadd.f32 %v931, %v1015
        %v1017 = vpop.f32.mrb[0].mxu0
        %1018 = vmatprep.mubr.bf16.mxu0 0
        %1019 = vmatmul.mubr.bf16.gmra.mrb[0].mxu0 %v957
        %v1020 = vpop.f32.mrb[0].mxu0
        %v1021 = vadd.f32 %v936, %v1020
        %v1022 = vpop.f32.mrb[0].mxu0
        %v1023 = vpop.f32.mrb[0].mxu0
        %v1024 = vadd.f32 %v939, %v1023
        %v1025 = vpop.f32.mrb[0].mxu0
        %1026 = vdwg.mxu0
        %s1027 = scalar_lea.vmem [#allocation2], 32
        %v1028 = vld [vmem:[%s1027] sm:$0xff]
        %v1029 = vld [vmem:[%s1027 + $0x8] sm:$0x3]
        %v1030 = vld [vmem:[%s1027 + $0x10] sm:$0xff]
        %v1031 = vld [vmem:[%s1027 + $0x18] sm:$0x3]
        %v1032 = vld [vmem:[%s1027 + $0x20] sm:$0xff]
        %v1033 = vld [vmem:[%s1027 + $0x28] sm:$0x3]
        %v1034 = vld [vmem:[%s1027 + $0x30] sm:$0xff]
        %v1035 = vld [vmem:[%s1027 + $0x38] sm:$0x3]
        %v1036 = vld [vmem:[%s1027 + $0x40] sm:$0xff]
        %v1037 = vld [vmem:[%s1027 + $0x48] sm:$0x3]
        %v1038 = vld [vmem:[%s1027 + $0x50] sm:$0xff]
        %v1039 = vld [vmem:[%s1027 + $0x58] sm:$0x3]
        %v1040 = vld [vmem:[%s1027 + $0x60] sm:$0xff]
        %v1041 = vld [vmem:[%s1027 + $0x68] sm:$0x3]
        %v1042 = vld [vmem:[%s1027 + $0x70] sm:$0xff]
        %v1043 = vld [vmem:[%s1027 + $0x78] sm:$0x3]
        %v1060 = vrot.slane %v1028, 1
        %v1061 = vrot.slane %v1029, 1
        %v1062 = vsel %vm584, %v1060, %v1061
        %v1063 = vrot.slane %v1030, 1
        %v1064 = vrot.slane %v1031, 1
        %v1065 = vsel %vm584, %v1063, %v1064
        %v1066 = vrot.slane %v1032, 1
        %v1067 = vrot.slane %v1033, 1
        %v1068 = vsel %vm584, %v1066, %v1067
        %v1069 = vrot.slane %v1034, 1
        %v1070 = vrot.slane %v1035, 1
        %v1071 = vsel %vm584, %v1069, %v1070
        %v1072 = vrot.slane %v1036, 1
        %v1073 = vrot.slane %v1037, 1
        %v1074 = vsel %vm584, %v1072, %v1073
        %v1075 = vrot.slane %v1038, 1
        %v1076 = vrot.slane %v1039, 1
        %v1077 = vsel %vm584, %v1075, %v1076
        %v1078 = vrot.slane %v1040, 1
        %v1079 = vrot.slane %v1041, 1
        %v1080 = vsel %vm584, %v1078, %v1079
        %v1081 = vrot.slane %v1042, 1
        %v1082 = vrot.slane %v1043, 1
        %v1083 = vsel %vm584, %v1081, %v1082
        %1084 = vrot.lane.b32.xlu0 %v1062, 4
        %v1085 = vpop.permute.xlu0 %1084
        %1086 = vrot.lane.b32.xlu0 %v1065, 4
        %v1087 = vpop.permute.xlu0 %1086
        %1088 = vrot.lane.b32.xlu0 %v1068, 4
        %v1089 = vpop.permute.xlu0 %1088
        %1090 = vrot.lane.b32.xlu0 %v1071, 4
        %v1091 = vpop.permute.xlu0 %1090
        %1092 = vrot.lane.b32.xlu0 %v1074, 4
        %v1093 = vpop.permute.xlu0 %1092
        %1094 = vrot.lane.b32.xlu0 %v1077, 4
        %v1095 = vpop.permute.xlu0 %1094
        %1096 = vrot.lane.b32.xlu0 %v1080, 4
        %v1097 = vpop.permute.xlu0 %1096
        %1098 = vrot.lane.b32.xlu0 %v1083, 4
        %v1099 = vpop.permute.xlu0 %1098
        %v1108 = vrot.slane %v1028, 2
        %v1109 = vrot.slane %v1029, 2
        %v1110 = vsel %vm633, %v1108, %v1109
        %v1111 = vrot.slane %v1030, 2
        %v1112 = vrot.slane %v1031, 2
        %v1113 = vsel %vm633, %v1111, %v1112
        %v1114 = vrot.slane %v1032, 2
        %v1115 = vrot.slane %v1033, 2
        %v1116 = vsel %vm633, %v1114, %v1115
        %v1117 = vrot.slane %v1034, 2
        %v1118 = vrot.slane %v1035, 2
        %v1119 = vsel %vm633, %v1117, %v1118
        %v1120 = vrot.slane %v1036, 2
        %v1121 = vrot.slane %v1037, 2
        %v1122 = vsel %vm633, %v1120, %v1121
        %v1123 = vrot.slane %v1038, 2
        %v1124 = vrot.slane %v1039, 2
        %v1125 = vsel %vm633, %v1123, %v1124
        %v1126 = vrot.slane %v1040, 2
        %v1127 = vrot.slane %v1041, 2
        %v1128 = vsel %vm633, %v1126, %v1127
        %v1129 = vrot.slane %v1042, 2
        %v1130 = vrot.slane %v1043, 2
        %v1131 = vsel %vm633, %v1129, %v1130
        %1132 = vrot.lane.b32.xlu0 %v1110, 8
        %v1133 = vpop.permute.xlu0 %1132
        %1134 = vrot.lane.b32.xlu0 %v1113, 8
        %v1135 = vpop.permute.xlu0 %1134
        %1136 = vrot.lane.b32.xlu0 %v1116, 8
        %v1137 = vpop.permute.xlu0 %1136
        %1138 = vrot.lane.b32.xlu0 %v1119, 8
        %v1139 = vpop.permute.xlu0 %1138
        %1140 = vrot.lane.b32.xlu0 %v1122, 8
        %v1141 = vpop.permute.xlu0 %1140
        %1142 = vrot.lane.b32.xlu0 %v1125, 8
        %v1143 = vpop.permute.xlu0 %1142
        %1144 = vrot.lane.b32.xlu0 %v1128, 8
        %v1145 = vpop.permute.xlu0 %1144
        %1146 = vrot.lane.b32.xlu0 %v1131, 8
        %v1147 = vpop.permute.xlu0 %1146
        %v1156 = vsel %vm515, %v1028, %v1085
        %v1157 = vsel %vm515, %v1030, %v1087
        %v1158 = vsel %vm515, %v1032, %v1089
        %v1159 = vsel %vm515, %v1034, %v1091
        %v1160 = vsel %vm515, %v1036, %v1093
        %v1161 = vsel %vm515, %v1038, %v1095
        %v1162 = vsel %vm515, %v1040, %v1097
        %v1163 = vsel %vm515, %v1042, %v1099
        %v1164 = vsel %vm690, %v1156, %v1133
        %v1165 = vsel %vm690, %v1157, %v1135
        %v1166 = vsel %vm690, %v1158, %v1137
        %v1167 = vsel %vm690, %v1159, %v1139
        %v1168 = vsel %vm690, %v1160, %v1141
        %v1169 = vsel %vm690, %v1161, %v1143
        %v1170 = vsel %vm690, %v1162, %v1145
        %v1171 = vsel %vm690, %v1163, %v1147
        %v1172 = vpack.c.bf16 %v1165, %v1164
        %v1173 = vpack.c.bf16 %v1167, %v1166
        %v1174 = vpack.c.bf16 %v1169, %v1168
        %v1175 = vpack.c.bf16 %v1171, %v1170
        %s1176 = scalar_lea.vmem %s2, 16
        %v1177 = vld [vmem:[%s1176] sm:$0xf]
        %v1178 = vld [vmem:[%s1176 + $0x4] sm:$0x3]
        %v1181 = vunpack.c.l.b16 %v1177
        %v1182 = vunpack.c.l.b16 %v1178
        %v1183 = vpack.c.b16 %v1182, %v1181
        %v1185 = vsel %vm861, %v1172, 0
        %v1188 = vsel %vm861, %v1173, 0
        %v1191 = vsel %vm861, %v1174, 0
        %v1194 = vsel %vm861, %v1175, 0
        %v1197 = vsel %vm633, %v1183, 0
        %1199 = vmatprep.subr.bf16.mxu0 0
        %1200 = vmatpush1.bf16.msra.mxu0 %v1197
        %1201 = vmatprep.subr.bf16.mxu0 0
        %1202 = vmatpush1.bf16.msra.mxu0 0
        %1203 = vmatprep.subr.bf16.mxu0 0
        %1204 = vmatpush1.bf16.msra.mxu0 0
        %1205 = vmatprep.subr.bf16.mxu0 0
        %1206 = vmatpush1.bf16.msra.mxu0 0
        %1207 = vmatprep.subr.bf16.mxu0 0
        %1208 = vmatpush1.bf16.msra.mxu0 0
        %1209 = vmatprep.subr.bf16.mxu0 0
        %1210 = vmatpush1.bf16.msra.mxu0 0
        %1211 = vmatprep.subr.bf16.mxu0 0
        %1212 = vmatpush1.bf16.msra.mxu0 0
        %1213 = vmatprep.subr.bf16.mxu0 0
        %1214 = vmatpush1.bf16.msra.mxu0 0
        %1215 = vmatprep.subr.bf16.mxu0 0
        %1216 = vmatpush1.bf16.msra.mxu0 0
        %1217 = vmatprep.subr.bf16.mxu0 0
        %1218 = vmatpush1.bf16.msra.mxu0 0
        %1219 = vmatprep.subr.bf16.mxu0 0
        %1220 = vmatpush1.bf16.msra.mxu0 0
        %1221 = vmatprep.subr.bf16.mxu0 0
        %1222 = vmatpush1.bf16.msra.mxu0 0
        %1223 = vmatprep.subr.bf16.mxu0 0
        %1224 = vmatpush1.bf16.msra.mxu0 0
        %1225 = vmatprep.subr.bf16.mxu0 0
        %1226 = vmatpush1.bf16.msra.mxu0 0
        %1227 = vmatprep.subr.bf16.mxu0 0
        %1228 = vmatpush1.bf16.msra.mxu0 0
        %1229 = vmatprep.subr.bf16.mxu0 0
        %1230 = vmatpush1.bf16.msra.mxu0 0
        %1231 = vmatprep.mubr.bf16.mxu0 0
        %1232 = vmatmul.mubr.bf16.gmra.mrb[0].mxu0 %v1185
        %v1233 = vpop.f32.mrb[0].mxu0
        %v1234 = vadd.f32 0.0, %v1233
        %v1235 = vpop.f32.mrb[0].mxu0
        %v1236 = vpop.f32.mrb[0].mxu0
        %v1237 = vadd.f32 0.0, %v1236
        %v1238 = vpop.f32.mrb[0].mxu0
        %1239 = vmatprep.mubr.bf16.mxu0 0
        %1240 = vmatmul.mubr.bf16.gmra.mrb[0].mxu0 %v1188
        %v1241 = vpop.f32.mrb[0].mxu0
        %v1242 = vadd.f32 0.0, %v1241
        %v1243 = vpop.f32.mrb[0].mxu0
        %v1244 = vpop.f32.mrb[0].mxu0
        %v1245 = vadd.f32 0.0, %v1244
        %v1246 = vpop.f32.mrb[0].mxu0
        %1247 = vmatprep.mubr.bf16.mxu0 0
        %1248 = vmatmul.mubr.bf16.gmra.mrb[0].mxu0 %v1191
        %v1249 = vpop.f32.mrb[0].mxu0
        %v1250 = vadd.f32 0.0, %v1249
        %v1251 = vpop.f32.mrb[0].mxu0
        %v1252 = vpop.f32.mrb[0].mxu0
        %v1253 = vadd.f32 0.0, %v1252
        %v1254 = vpop.f32.mrb[0].mxu0
        %1255 = vmatprep.mubr.bf16.mxu0 0
        %1256 = vmatmul.mubr.bf16.gmra.mrb[0].mxu0 %v1194
        %v1257 = vpop.f32.mrb[0].mxu0
        %v1258 = vadd.f32 0.0, %v1257
        %v1259 = vpop.f32.mrb[0].mxu0
        %v1260 = vpop.f32.mrb[0].mxu0
        %v1261 = vadd.f32 0.0, %v1260
        %v1262 = vpop.f32.mrb[0].mxu0
        %1263 = vdwg.mxu0
        %v1264 = vadd.f32 %v997, %v1234
        %v1265 = vadd.f32 %v1000, %v1237
        %v1266 = vadd.f32 %v1005, %v1242
        %v1267 = vadd.f32 %v1008, %v1245
        %v1268 = vadd.f32 %v1013, %v1250
        %v1269 = vadd.f32 %v1016, %v1253
        %v1270 = vadd.f32 %v1021, %v1258
        %v1271 = vadd.f32 %v1024, %v1261
        %v1272 = vld [vmem:[%s6] sm:$0x1]
        %v1274 = vlaneseq
        %v1275 = vshrl.u32 %v1274, 7
        %v1276 = vsub.s32 0, %v1275
        %v1277 = vrot.slane %v1272, %v1276
        %v1279 = vmul.f32 %v1264, %v1277
        %v1280 = vmul.f32 %v1265, %v1277
        %v1281 = vmul.f32 %v1266, %v1277
        %v1282 = vmul.f32 %v1267, %v1277
        %v1283 = vmul.f32 %v1268, %v1277
        %v1284 = vmul.f32 %v1269, %v1277
        %v1285 = vmul.f32 %v1270, %v1277
        %v1286 = vmul.f32 %v1271, %v1277
        %v1287 = vld [vmem:[%s7] sm:$0x1]
        %v1289 = vlaneseq
        %v1290 = vshrl.u32 %v1289, 7
        %v1291 = vsub.s32 0, %v1290
        %v1292 = vrot.slane %v1287, %v1291
        %v1294 = vadd.f32 %v1279, %v1292
        %v1295 = vadd.f32 %v1280, %v1292
        %v1296 = vadd.f32 %v1281, %v1292
        %v1297 = vadd.f32 %v1282, %v1292
        %v1298 = vadd.f32 %v1283, %v1292
        %v1299 = vadd.f32 %v1284, %v1292
        %v1300 = vadd.f32 %v1285, %v1292
        %v1301 = vadd.f32 %v1286, %v1292
        %v1302 = vmax.f32 %v1294, 0.0
        %v1303 = vmax.f32 %v1295, 0.0
        %v1304 = vmax.f32 %v1296, 0.0
        %v1305 = vmax.f32 %v1297, 0.0
        %v1306 = vmax.f32 %v1298, 0.0
        %v1307 = vmax.f32 %v1299, 0.0
        %v1308 = vmax.f32 %v1300, 0.0
        %v1309 = vmax.f32 %v1301, 0.0
        %v1310 = vpack.c.bf16 %v1303, %v1302
        %v1311 = vpack.c.bf16 %v1305, %v1304
        %v1312 = vpack.c.bf16 %v1307, %v1306
        %v1313 = vpack.c.bf16 %v1309, %v1308
        %v1314 = vld [vmem:[%s3] sm:$0x3]
        %v1316 = vsel %vm515, %v1310, 0
        %v1319 = vsel %vm515, %v1311, 0
        %v1322 = vsel %vm515, %v1312, 0
        %v1325 = vsel %vm515, %v1313, 0
        %vm1327 = vcmask 1041408
        %v1329 = vsel %vm1327, %v1314, 0
        %1331 = vmatprep.subr.bf16.mxu0 0
        %1332 = vmatpush1.bf16.msra.mxu0 %v1329
        %1333 = vmatprep.subr.bf16.mxu0 0
        %1334 = vmatpush1.bf16.msra.mxu0 0
        %1335 = vmatprep.subr.bf16.mxu0 0
        %1336 = vmatpush1.bf16.msra.mxu0 0
        %1337 = vmatprep.subr.bf16.mxu0 0
        %1338 = vmatpush1.bf16.msra.mxu0 0
        %1339 = vmatprep.subr.bf16.mxu0 0
        %1340 = vmatpush1.bf16.msra.mxu0 0
        %1341 = vmatprep.subr.bf16.mxu0 0
        %1342 = vmatpush1.bf16.msra.mxu0 0
        %1343 = vmatprep.subr.bf16.mxu0 0
        %1344 = vmatpush1.bf16.msra.mxu0 0
        %1345 = vmatprep.subr.bf16.mxu0 0
        %1346 = vmatpush1.bf16.msra.mxu0 0
        %1347 = vmatprep.subr.bf16.mxu0 0
        %1348 = vmatpush1.bf16.msra.mxu0 0
        %1349 = vmatprep.subr.bf16.mxu0 0
        %1350 = vmatpush1.bf16.msra.mxu0 0
        %1351 = vmatprep.subr.bf16.mxu0 0
        %1352 = vmatpush1.bf16.msra.mxu0 0
        %1353 = vmatprep.subr.bf16.mxu0 0
        %1354 = vmatpush1.bf16.msra.mxu0 0
        %1355 = vmatprep.subr.bf16.mxu0 0
        %1356 = vmatpush1.bf16.msra.mxu0 0
        %1357 = vmatprep.subr.bf16.mxu0 0
        %1358 = vmatpush1.bf16.msra.mxu0 0
        %1359 = vmatprep.subr.bf16.mxu0 0
        %1360 = vmatpush1.bf16.msra.mxu0 0
        %1361 = vmatprep.subr.bf16.mxu0 0
        %1362 = vmatpush1.bf16.msra.mxu0 0
        %1363 = vmatprep.mubr.bf16.mxu0 0
        %1364 = vmatmul.mubr.bf16.gmra.mrb[0].mxu0 %v1316
        %v1365 = vpop.f32.mrb[0].mxu0
        %v1366 = vadd.f32 0.0, %v1365
        %v1367 = vpop.f32.mrb[0].mxu0
        %v1368 = vpop.f32.mrb[0].mxu0
        %v1369 = vadd.f32 0.0, %v1368
        %v1370 = vpop.f32.mrb[0].mxu0
        %1371 = vmatprep.mubr.bf16.mxu0 0
        %1372 = vmatmul.mubr.bf16.gmra.mrb[0].mxu0 %v1319
        %v1373 = vpop.f32.mrb[0].mxu0
        %v1374 = vadd.f32 0.0, %v1373
        %v1375 = vpop.f32.mrb[0].mxu0
        %v1376 = vpop.f32.mrb[0].mxu0
        %v1377 = vadd.f32 0.0, %v1376
        %v1378 = vpop.f32.mrb[0].mxu0
        %1379 = vmatprep.mubr.bf16.mxu0 0
        %1380 = vmatmul.mubr.bf16.gmra.mrb[0].mxu0 %v1322
        %v1381 = vpop.f32.mrb[0].mxu0
        %v1382 = vadd.f32 0.0, %v1381
        %v1383 = vpop.f32.mrb[0].mxu0
        %v1384 = vpop.f32.mrb[0].mxu0
        %v1385 = vadd.f32 0.0, %v1384
        %v1386 = vpop.f32.mrb[0].mxu0
        %1387 = vmatprep.mubr.bf16.mxu0 0
        %1388 = vmatmul.mubr.bf16.gmra.mrb[0].mxu0 %v1325
        %v1389 = vpop.f32.mrb[0].mxu0
        %v1390 = vadd.f32 0.0, %v1389
        %v1391 = vpop.f32.mrb[0].mxu0
        %v1392 = vpop.f32.mrb[0].mxu0
        %v1393 = vadd.f32 0.0, %v1392
        %v1394 = vpop.f32.mrb[0].mxu0
        %1395 = vdwg.mxu0
        %v1396 = vld [vmem:[%s8] sm:$0x1]
        %v1398 = vlaneseq
        %v1399 = vshrl.u32 %v1398, 7
        %v1400 = vsub.s32 0, %v1399
        %v1401 = vrot.slane %v1396, %v1400
        %v1403 = vmul.f32 %v1366, %v1401
        %v1404 = vmul.f32 %v1369, %v1401
        %v1405 = vmul.f32 %v1374, %v1401
        %v1406 = vmul.f32 %v1377, %v1401
        %v1407 = vmul.f32 %v1382, %v1401
        %v1408 = vmul.f32 %v1385, %v1401
        %v1409 = vmul.f32 %v1390, %v1401
        %v1410 = vmul.f32 %v1393, %v1401
        %v1411 = vld [vmem:[%s9] sm:$0x1]
        %v1413 = vlaneseq
        %v1414 = vshrl.u32 %v1413, 7
        %v1415 = vsub.s32 0, %v1414
        %v1416 = vrot.slane %v1411, %v1415
        %v1418 = vadd.f32 %v1403, %v1416
        %v1419 = vadd.f32 %v1404, %v1416
        %v1420 = vadd.f32 %v1405, %v1416
        %v1421 = vadd.f32 %v1406, %v1416
        %v1422 = vadd.f32 %v1407, %v1416
        %v1423 = vadd.f32 %v1408, %v1416
        %v1424 = vadd.f32 %v1409, %v1416
        %v1425 = vadd.f32 %v1410, %v1416
        %v1426 = vadd.f32 %v1418, %v379
        %v1427 = vadd.f32 %v1419, %v380
        %v1428 = vadd.f32 %v1420, %v381
        %v1429 = vadd.f32 %v1421, %v382
        %v1430 = vadd.f32 %v1422, %v383
        %v1431 = vadd.f32 %v1423, %v384
        %v1432 = vadd.f32 %v1424, %v385
        %v1433 = vadd.f32 %v1425, %v386
        %v1434 = vmax.f32 %v1426, 0.0
        %v1435 = vmax.f32 %v1427, 0.0
        %v1436 = vmax.f32 %v1428, 0.0
        %v1437 = vmax.f32 %v1429, 0.0
        %v1438 = vmax.f32 %v1430, 0.0
        %v1439 = vmax.f32 %v1431, 0.0
        %v1440 = vmax.f32 %v1432, 0.0
        %v1441 = vmax.f32 %v1433, 0.0
        %1442 = vst.msk [vmem:[%s377] sm:$0xff] %vm399, %v1434
        %1443 = vst.msk [vmem:[%s377 + $0x8] sm:$0xff] %vm399, %v1435
        %1444 = vst.msk [vmem:[%s377 + $0x10] sm:$0xff] %vm399, %v1436
        %1445 = vst.msk [vmem:[%s377 + $0x18] sm:$0xff] %vm399, %v1437
        %1446 = vst.msk [vmem:[%s377 + $0x20] sm:$0xff] %vm399, %v1438
        %1447 = vst.msk [vmem:[%s377 + $0x28] sm:$0xff] %vm399, %v1439
        %1448 = vst.msk [vmem:[%s377 + $0x30] sm:$0xff] %vm399, %v1440
        %1449 = vst.msk [vmem:[%s377 + $0x38] sm:$0xff] %vm399, %v1441
        %s1450 = sand.u32 %s250, 1
        %s1451 = scalar_lea.sflag [#allocation5], %s1450
        %s1452 = sand.u32 %s250, 1
        %s1453 = smul.addr %s1452, 64
        %s1454 = scalar_lea.vmem [#allocation6], %s1453
        // Predicated region
        $region65: #{tpu_custom_call.1} parent=59 // pred_check
          %p1455 = pneg %p260
        $region66: #{tpu_custom_call.1} parent=59 // pred_check_branch
          %1457 = sbr.rel (%p1455) target = $region68
        $region67: #{tpu_custom_call.1} parent=59 // pred_region
          %s1459 = ssub.s32 1024, 1024
          %1460 = vsyncadd %s1451, %s1459
          %s1461 = smul.addr %s27, 8
          %s1462 = smul.addr %s1461, 128
          %s1463 = scalar_lea.hbm %s10, %s1462
          %s1464 = sshll.u32 %s1454, 4
          %s1465 = int_to_ptr.vmem [resolvable:$true] %s1464
          %1470 = dma.vmem_to_hbm [thread:$0]  %s1465, 1024, %s1463, %s1451, 128, 128, 8
        $region68: #{tpu_custom_call.1} parent=59 // pred_fallthru
          _
      $region60: #{tpu_custom_call.1} parent=5 // pred_fallthru
        _
      %p1471 = scmp.le.s32.totalorder 2, %s22
      // Predicated region
      $region69: #{tpu_custom_call.1} parent=5 // pred_check
        %p1472 = pneg %p1471
      $region70: #{tpu_custom_call.1} parent=5 // pred_check_branch
        %1474 = sbr.rel (%p1472) target = $region72
      $region71: #{tpu_custom_call.1} parent=5 // pred_region
        %s1475 = ssub.s32 %s22, 2
        // Predicated region
        $region73: #{tpu_custom_call.1} parent=71 // pred_check
          %p1476 = pneg %p266
        $region74: #{tpu_custom_call.1} parent=71 // pred_check_branch
          %1478 = sbr.rel (%p1476) target = $region76
        $region75: #{tpu_custom_call.1} parent=71 // pred_region
          %s1479 = sand.u32 %s251, 1
          %s1480 = scalar_lea.sflag [#allocation5], %s1479
          %s1481 = sand.u32 %s251, 1
          %s1482 = smul.addr %s1481, 64
          %s1483 = scalar_lea.vmem [#allocation6], %s1482
          %1484 = dma.done %s1480, 1024
        $region76: #{tpu_custom_call.1} parent=71 // pred_fallthru
          _
      $region72: #{tpu_custom_call.1} parent=5 // pred_fallthru
        _
    $region6: #{tpu_custom_call.1} parent=1 // loop_footer
      %s26 = sadd.s32 1, %s22
    $region7: #{tpu_custom_call.1} parent=1 // loop_footer_branch
      %21 = sbr.rel target = $region3
    $region8: #{tpu_custom_call.1} parent=1 // loop_exit
      _
    %1485 = vsyncpa [#allocation4], 1
    %s1486 = scalar_lea.sflag [#allocation4], 1
    %1487 = vsyncpa %s1486, 1
    %1488 = vsyncpa [#allocation5], 1
    %s1489 = scalar_lea.sflag [#allocation5], 1
    %1490 = vsyncpa %s1489, 1

</llo_original>
